<compile_context>
chip_gen: v6e
topology: v6e:2x2x1
jax: 0.10.0
libtpu: 0.0.40
codegen_flags: <defaults>
</compile_context>

<pallas_src>
import jax
import jax.numpy as jnp
from jax.experimental import pallas as pl
from jax.experimental.pallas import tpu as pltpu

_NUM_BINS = 16        # DistanceValueEncoder(num_bins=16, min_val=0, max_val=1)
_HIDDEN = 64          # Conv2d(32 -> 64, k=1) -> BN -> ReLU -> Conv2d(64 -> 1, k=1)
_BN_EPS = 1e-5


# ----------------------------------------------------------------------------- kernel
def _fused_kernel(scal_ref, tr_ref, te_ref, lbl_ref, ts_ref,
                  dt_ref, ut_ref, w1_ref, b1_ref, w2_ref, out_ref):
    """One sequence per grid step.

    scal_ref: (2,) SMEM              [softmax_temp, b2]
    tr_ref  : (1, nmem, whf, c)      train features (channels last)
    te_ref  : (1, whf, c)            test features  (channels last)
    lbl_ref : (1, nmem, whl)         flattened train labels
    ts_ref  : (1, nte, whl)          flattened test scores
    dt_ref  : (whl, whf)             down-sample interpolation matrix (transposed)
    ut_ref  : (whf, whl)             up-sample interpolation matrix (transposed)
    w1_ref  : (64, 32), b1_ref: (64, 1)   conv1 with eval-mode BatchNorm folded in
    w2_ref  : (1, 64)                conv2 weight
    out_ref : (1, nte, whl)
    """
    temp = scal_ref[0]
    b2 = scal_ref[1]

    tr = tr_ref[0]                                      # (nmem, whf, c)
    te = te_ref[0]                                      # (whf, c)
    nmem = tr.shape[0]

    # ---- down-sample train labels onto the feature grid (bilinear as one matmul)
    mem = jnp.dot(lbl_ref[0], dt_ref[...],
                  preferred_element_type=jnp.float32)   # (nmem, whf)

    # ---- cosine normalization over channels (once per sequence, rsqrt -> EUP)
    te_n = te * jax.lax.rsqrt(jnp.sum(te * te, axis=-1, keepdims=True) + 1e-12)
    tr_n = tr * jax.lax.rsqrt(jnp.sum(tr * tr, axis=-1, keepdims=True) + 1e-12)

    # ---- similarity for all memory frames at once (batched MXU matmul, bf16 in / f32 acc)
    te_b = jnp.broadcast_to(te_n.astype(jnp.bfloat16)[None], tr_n.shape)
    sim = jnp.einsum('mic,mjc->mij', te_b, tr_n.astype(jnp.bfloat16),
                     preferred_element_type=jnp.float32)        # (nmem, whf_te, whf_tr)

    # ---- softmax over train positions, per memory frame (matches torch.softmax)
    s = temp * sim
    e = jnp.exp(s - jnp.max(s, axis=-1, keepdims=True))
    p = e * pl.reciprocal(jnp.sum(e, axis=-1, keepdims=True), approx=True)

    # ---- project labels onto the test grid: z[m, i] = sum_j p[m, i, j] * mem[m, j]
    z = jnp.sum(p * mem[:, None, :], axis=-1)                    # (nmem, whf)

    # ---- up-sample to the score grid (bilinear as one matmul)
    pmt = jnp.dot(z, ut_ref[...], preferred_element_type=jnp.float32)   # (nmem, whl)

    # ---- mean / unbiased std over memory frames (torch.std default: unbiased)
    mean = jnp.mean(pmt, axis=0, keepdims=True)                  # (1, whl)
    diff = pmt - mean
    var = jnp.sum(diff * diff, axis=0, keepdims=True) * (1.0 / max(nmem - 1, 1))
    std = jnp.sqrt(var)

    # TODO(synk): DistanceValueEncoder source was not provided; implemented here as the
    # standard triangular soft-binning (linear interpolation) over 16 bins on [0, 1].
    pos = (jax.lax.broadcasted_iota(jnp.int32, (_NUM_BINS, 1), 0).astype(jnp.float32)
           / (_NUM_BINS - 1))                                    # bin centers, (16, 1)

    def encode(v):                                               # (1, whl) -> (16, whl)
        v = jnp.clip(v, 0.0, 1.0)
        return jnp.maximum(1.0 - jnp.abs(v - pos) * (_NUM_BINS - 1), 0.0)

    enc = jnp.concatenate([encode(jnp.tanh(mean)),
                           encode(jnp.tanh(std))], axis=0)       # (32, whl)

    # ---- Conv2d(32->64, k=1) + BN(eval, folded) + ReLU, then Conv2d(64->1, k=1)
    h = jnp.maximum(jnp.dot(w1_ref[...], enc, preferred_element_type=jnp.float32)
                    + b1_ref[...], 0.0)                          # (64, whl)
    scaling = jnp.dot(w2_ref[...], h, preferred_element_type=jnp.float32) + b2   # (1, whl)

    # ---- softplus(scaling * mean) (beta=1, threshold=20), subtract from test scores
    sm = scaling * mean
    sp = jnp.where(sm > 20.0, sm, jnp.log1p(jnp.exp(jnp.minimum(sm, 20.0))))
    out_ref[0] = ts_ref[0] - sp                                  # broadcast over nte


# ------------------------------------------------------------------------ plain-JAX glue
def _interp_matrix(out_size, in_size):
    """Row matrix of F.interpolate(mode='bilinear', align_corners=False): (out, in)."""
    i = jnp.arange(out_size, dtype=jnp.float32)
    s = jnp.maximum((i + 0.5) * (in_size / out_size) - 0.5, 0.0)
    lo = jnp.minimum(jnp.floor(s).astype(jnp.int32), in_size - 1)
    hi = jnp.minimum(lo + 1, in_size - 1)
    w = s - lo.astype(jnp.float32)
    return (jax.nn.one_hot(lo, in_size) * (1.0 - w)[:, None]
            + jax.nn.one_hot(hi, in_size) * w[:, None])


# -------------------------------------------------------------------------- pallas call
def attention_learn_score_scaling_forward(params, test_scores, train_labels,
                                          test_feat, train_feats):
    """Equivalent of AttentionLearnScoreScalingModule.forward.

    TODO(synk): BatchNorm is applied in eval mode (running stats folded into conv1);
    training-mode batch statistics are not reproduced inside the kernel.
    """
    nte, nseq, wl, hl = test_scores.shape
    nmem, _, c, wf, hf = train_feats.shape
    whf, whl = wf * hf, wl * hl

    # One-time layout prep so every in-kernel lane axis is dense (whf / whl / c).
    tr = train_feats.reshape(nmem, nseq, c, whf).transpose(1, 0, 3, 2)      # (nseq,nmem,whf,c)
    te = test_feat.reshape(test_feat.shape[0], nseq, c, whf)[0].transpose(0, 2, 1)  # (nseq,whf,c)
    lbl = train_labels.reshape(nmem, nseq, whl).transpose(1, 0, 2)          # (nseq, nmem, whl)
    ts = test_scores.reshape(nte, nseq, whl).transpose(1, 0, 2)             # (nseq, nte, whl)

    # Separable bilinear resizes as Kronecker interpolation matrices (fused into the kernel).
    dmat = jnp.kron(_interp_matrix(wf, wl), _interp_matrix(hf, hl))         # (whf, whl)
    umat = jnp.kron(_interp_matrix(wl, wf), _interp_matrix(hl, hf))         # (whl, whf)

    # Fold BatchNorm (eval) + conv1 bias into conv1's weight/bias.
    bn = params["bn"]
    gamma, beta, rmean, rvar = bn[0], bn[1], bn[2], bn[3]
    scale = gamma * jax.lax.rsqrt(rvar + _BN_EPS)
    w1 = params["w1"] * scale[:, None]                                      # (64, 32)
    b1 = ((params["b1"] - rmean) * scale + beta)[:, None]                   # (64, 1)
    w2 = params["w2"]                                                       # (1, 64)
    scalars = jnp.stack([params["softmax_temp"][0], params["b2"][0]])       # (2,) -> SMEM

    out = pl.pallas_call(
        _fused_kernel,
        out_shape=jax.ShapeDtypeStruct((nseq, nte, whl), jnp.float32),
        grid=(nseq,),
        in_specs=[
            pl.BlockSpec(memory_space=pltpu.MemorySpace.SMEM),              # [temp, b2]
            pl.BlockSpec((1, nmem, whf, c), lambda n: (n, 0, 0, 0)),        # train feats
            pl.BlockSpec((1, whf, c), lambda n: (n, 0, 0)),                 # test feat
            pl.BlockSpec((1, nmem, whl), lambda n: (n, 0, 0)),              # train labels
            pl.BlockSpec((1, nte, whl), lambda n: (n, 0, 0)),               # test scores
            pl.BlockSpec((whl, whf), lambda n: (0, 0)),                     # down-sample mat^T
            pl.BlockSpec((whf, whl), lambda n: (0, 0)),                     # up-sample mat^T
            pl.BlockSpec((_HIDDEN, 2 * _NUM_BINS), lambda n: (0, 0)),       # W1 (BN folded)
            pl.BlockSpec((_HIDDEN, 1), lambda n: (0, 0)),                   # b1 (BN folded)
            pl.BlockSpec((1, _HIDDEN), lambda n: (0, 0)),                   # W2
        ],
        out_specs=pl.BlockSpec((1, nte, whl), lambda n: (n, 0, 0)),
        compiler_params=pltpu.CompilerParams(
            dimension_semantics=("parallel",)),
    )(scalars, tr, te, lbl, ts, dmat.T, umat.T, w1, b1, w2)

    return out.transpose(1, 0, 2).reshape(nte, nseq, wl, hl)


# ------------------------------------------------------------------------ parameter init
def init_params(key):
    k1, k2, k3, k4 = jax.random.split(key, 4)
    # 1x1 convs stored as (out_ch, in_ch) matrices.
    w1 = 0.1 * jax.random.normal(k1, (_HIDDEN, 2 * _NUM_BINS), jnp.float32)
    b1 = 0.1 * jax.random.normal(k2, (_HIDDEN,), jnp.float32)
    w2 = 0.1 * jax.random.normal(k3, (1, _HIDDEN), jnp.float32)
    b2 = 0.1 * jax.random.normal(k4, (1,), jnp.float32)
    bn = jnp.stack([jnp.ones(_HIDDEN), jnp.zeros(_HIDDEN),                  # gamma, beta
                    jnp.zeros(_HIDDEN), jnp.ones(_HIDDEN)]).astype(jnp.float32)  # mean, var
    return dict(softmax_temp=jnp.array([50.0], jnp.float32),                # softmax_temp_init
                w1=w1, b1=b1, bn=bn, w2=w2, b2=b2)


if __name__ == "__main__":
    nmem, nseq, c = 3, 2, 16
    wf, hf = 8, 8
    wl, hl = 16, 16
    nte = 1

    key = jax.random.PRNGKey(0)
    ks = jax.random.split(key, 5)
    train_feats = jax.random.normal(ks[0], (nmem, nseq, c, wf, hf), jnp.float32)
    test_feat = jax.random.normal(ks[1], (nte, nseq, c, wf, hf), jnp.float32)
    train_labels = jax.random.uniform(ks[2], (nmem, nseq, wl, hl), jnp.float32)
    test_scores = jax.random.normal(ks[3], (nte, nseq, wl, hl), jnp.float32)
    params = init_params(ks[4])

    fwd = jax.jit(attention_learn_score_scaling_forward)
    out = jax.block_until_ready(fwd(params, test_scores, train_labels,
                                    test_feat, train_feats))
    assert out.shape == (nte, nseq, wl, hl), out.shape
    assert bool(jnp.all(jnp.isfinite(out)))
    print("KERNEL_OK")
</pallas_src>

<mosaic_0001>
module attributes {stable_mosaic.version = 11 : i64} {
  func.func @_fused_kernel(%arg0: i32, %arg1: memref<2xf32, #tpu.memory_space<smem>>, %arg2: memref<1x3x64x16xf32, #tpu.memory_space<vmem>>, %arg3: memref<1x64x16xf32, #tpu.memory_space<vmem>>, %arg4: memref<1x3x256xf32, #tpu.memory_space<vmem>>, %arg5: memref<1x1x256xf32, #tpu.memory_space<vmem>>, %arg6: memref<256x64xf32, #tpu.memory_space<vmem>>, %arg7: memref<64x256xf32, #tpu.memory_space<vmem>>, %arg8: memref<64x32xf32, #tpu.memory_space<vmem>>, %arg9: memref<64x1xf32, #tpu.memory_space<vmem>>, %arg10: memref<1x64xf32, #tpu.memory_space<vmem>>, %arg11: memref<1x1x256xf32, #tpu.memory_space<vmem>>) attributes {dimension_semantics = [#tpu.dimension_semantics<parallel>], iteration_bounds = array<i64: 2>, scalar_prefetch = 0 : i64, scratch_operands = 0 : i64, tpu.core_type = #tpu.core_type<tc>, window_params = [{transform_indices = @transform_0, window_bounds = array<i64: 2>}, {transform_indices = @transform_1, window_bounds = array<i64: 1, 3, 64, 16>}, {transform_indices = @transform_2, window_bounds = array<i64: 1, 64, 16>}, {transform_indices = @transform_3, window_bounds = array<i64: 1, 3, 256>}, {transform_indices = @transform_4, window_bounds = array<i64: 1, 1, 256>}, {pipeline_mode = #tpu.pipeline_mode<synchronous>, transform_indices = @transform_5, window_bounds = array<i64: 256, 64>}, {pipeline_mode = #tpu.pipeline_mode<synchronous>, transform_indices = @transform_6, window_bounds = array<i64: 64, 256>}, {pipeline_mode = #tpu.pipeline_mode<synchronous>, transform_indices = @transform_7, window_bounds = array<i64: 64, 32>}, {pipeline_mode = #tpu.pipeline_mode<synchronous>, transform_indices = @transform_8, window_bounds = array<i64: 64, 1>}, {pipeline_mode = #tpu.pipeline_mode<synchronous>, transform_indices = @transform_9, window_bounds = array<i64: 1, 64>}, {transform_indices = @transform_10, window_bounds = array<i64: 1, 1, 256>}]} {
    %c0 = arith.constant 0 : index
    %0 = memref.load %arg1[%c0] : memref<2xf32, #tpu.memory_space<smem>>
    %c1 = arith.constant 1 : index
    %1 = memref.load %arg1[%c1] : memref<2xf32, #tpu.memory_space<smem>>
    %c0_0 = arith.constant 0 : index
    %c0_1 = arith.constant 0 : index
    %c0_2 = arith.constant 0 : index
    %c0_3 = arith.constant 0 : index
    %2 = vector.load %arg2[%c0_0, %c0_1, %c0_2, %c0_3] : memref<1x3x64x16xf32, #tpu.memory_space<vmem>>, vector<1x3x64x16xf32>
    %3 = vector.shape_cast %2 : vector<1x3x64x16xf32> to vector<3x64x16xf32>
    %c0_4 = arith.constant 0 : index
    %c0_5 = arith.constant 0 : index
    %c0_6 = arith.constant 0 : index
    %4 = vector.load %arg3[%c0_4, %c0_5, %c0_6] : memref<1x64x16xf32, #tpu.memory_space<vmem>>, vector<1x64x16xf32>
    %5 = vector.shape_cast %4 : vector<1x64x16xf32> to vector<64x16xf32>
    %c0_7 = arith.constant 0 : index
    %c0_8 = arith.constant 0 : index
    %c0_9 = arith.constant 0 : index
    %6 = vector.load %arg4[%c0_7, %c0_8, %c0_9] : memref<1x3x256xf32, #tpu.memory_space<vmem>>, vector<1x3x256xf32>
    %7 = vector.shape_cast %6 : vector<1x3x256xf32> to vector<3x256xf32>
    %c0_10 = arith.constant 0 : index
    %c0_11 = arith.constant 0 : index
    %8 = vector.load %arg6[%c0_10, %c0_11] : memref<256x64xf32, #tpu.memory_space<vmem>>, vector<256x64xf32>
    %cst = arith.constant dense<0.000000e+00> : vector<3x64xf32>
    %9 = tpu.matmul %7, %8, %cst {dimension_numbers = #tpu.dot_dimension_numbers<[1], [0], [0], [1], [0, 0, 1, 1], [], []>} : vector<3x256xf32>, vector<256x64xf32>, vector<3x64xf32> -> vector<3x64xf32>
    %10 = arith.mulf %5, %5 : vector<64x16xf32>
    %cst_12 = arith.constant dense<0.000000e+00> : vector<64xf32>
    %11 = vector.multi_reduction <add>, %10, %cst_12 [1] : vector<64x16xf32> to vector<64xf32>
    %12 = vector.shape_cast %11 : vector<64xf32> to vector<64x1xf32>
    %cst_13 = arith.constant 9.99999996E-13 : f32
    %13 = vector.broadcast %cst_13 : f32 to vector<64x1xf32>
    %14 = arith.addf %12, %13 : vector<64x1xf32>
    %15 = math.rsqrt %14 : vector<64x1xf32>
    %16 = vector.broadcast %15 : vector<64x1xf32> to vector<64x16xf32>
    %17 = arith.mulf %5, %16 : vector<64x16xf32>
    %18 = arith.mulf %3, %3 : vector<3x64x16xf32>
    %cst_14 = arith.constant dense<0.000000e+00> : vector<3x64xf32>
    %19 = vector.multi_reduction <add>, %18, %cst_14 [2] : vector<3x64x16xf32> to vector<3x64xf32>
    %20 = vector.shape_cast %19 : vector<3x64xf32> to vector<3x64x1xf32>
    %cst_15 = arith.constant 9.99999996E-13 : f32
    %21 = vector.broadcast %cst_15 : f32 to vector<3x64x1xf32>
    %22 = arith.addf %20, %21 : vector<3x64x1xf32>
    %23 = math.rsqrt %22 : vector<3x64x1xf32>
    %24 = vector.broadcast %23 : vector<3x64x1xf32> to vector<3x64x16xf32>
    %25 = arith.mulf %3, %24 : vector<3x64x16xf32>
    %26 = arith.truncf %17 : vector<64x16xf32> to vector<64x16xbf16>
    %27 = vector.shape_cast %26 : vector<64x16xbf16> to vector<1x64x16xbf16>
    %28 = vector.shape_cast %27 : vector<1x64x16xbf16> to vector<1x64x16xbf16>
    %29 = vector.broadcast %28 : vector<1x64x16xbf16> to vector<3x64x16xbf16>
    %30 = arith.truncf %25 : vector<3x64x16xf32> to vector<3x64x16xbf16>
    "tpu.trace_start"() <{level = 10 : i32, message = "mic,mjc->mij"}> : () -> ()
    %cst_16 = arith.constant dense<0.000000e+00> : vector<3x64x64xf32>
    %31 = tpu.matmul %29, %30, %cst_16 {dimension_numbers = #tpu.dot_dimension_numbers<[2], [2], [1], [1], [0, 0, 0, 1, 1, 1], [0], [0]>} : vector<3x64x16xbf16>, vector<3x64x16xbf16>, vector<3x64x64xf32> -> vector<3x64x64xf32>
    "tpu.trace_stop"() : () -> ()
    %32 = vector.broadcast %0 : f32 to vector<3x64x64xf32>
    %33 = arith.mulf %32, %31 : vector<3x64x64xf32>
    %cst_17 = arith.constant dense<0xFF800000> : vector<3x64xf32>
    %34 = vector.multi_reduction <maximumf>, %33, %cst_17 [2] : vector<3x64x64xf32> to vector<3x64xf32>
    %35 = vector.shape_cast %34 : vector<3x64xf32> to vector<3x64x1xf32>
    %36 = vector.broadcast %35 : vector<3x64x1xf32> to vector<3x64x64xf32>
    %37 = arith.subf %33, %36 : vector<3x64x64xf32>
    %38 = math.exp %37 : vector<3x64x64xf32>
    %cst_18 = arith.constant dense<0.000000e+00> : vector<3x64xf32>
    %39 = vector.multi_reduction <add>, %38, %cst_18 [2] : vector<3x64x64xf32> to vector<3x64xf32>
    %40 = vector.shape_cast %39 : vector<3x64xf32> to vector<3x64x1xf32>
    %41 = tpu.reciprocal %40 {approx = true} : vector<3x64x1xf32> -> vector<3x64x1xf32>
    %42 = vector.broadcast %41 : vector<3x64x1xf32> to vector<3x64x64xf32>
    %43 = arith.mulf %38, %42 : vector<3x64x64xf32>
    %44 = vector.shape_cast %9 : vector<3x64xf32> to vector<3x1x64xf32>
    %45 = vector.broadcast %44 : vector<3x1x64xf32> to vector<3x64x64xf32>
    %46 = arith.mulf %43, %45 : vector<3x64x64xf32>
    %cst_19 = arith.constant dense<0.000000e+00> : vector<3x64xf32>
    %47 = vector.multi_reduction <add>, %46, %cst_19 [2] : vector<3x64x64xf32> to vector<3x64xf32>
    %c0_20 = arith.constant 0 : index
    %c0_21 = arith.constant 0 : index
    %48 = vector.load %arg7[%c0_20, %c0_21] : memref<64x256xf32, #tpu.memory_space<vmem>>, vector<64x256xf32>
    %cst_22 = arith.constant dense<0.000000e+00> : vector<3x256xf32>
    %49 = tpu.matmul %47, %48, %cst_22 {dimension_numbers = #tpu.dot_dimension_numbers<[1], [0], [0], [1], [0, 0, 1, 1], [], []>} : vector<3x64xf32>, vector<64x256xf32>, vector<3x256xf32> -> vector<3x256xf32>
    %cst_23 = arith.constant dense<0.000000e+00> : vector<256xf32>
    %50 = vector.multi_reduction <add>, %49, %cst_23 [0] : vector<3x256xf32> to vector<256xf32>
    %51 = vector.shape_cast %50 : vector<256xf32> to vector<1x256xf32>
    %cst_24 = arith.constant 3.000000e+00 : f32
    %52 = vector.broadcast %cst_24 : f32 to vector<1x256xf32>
    %53 = arith.divf %51, %52 : vector<1x256xf32>
    %54 = vector.broadcast %53 : vector<1x256xf32> to vector<3x256xf32>
    %55 = arith.subf %49, %54 : vector<3x256xf32>
    %56 = arith.mulf %55, %55 : vector<3x256xf32>
    %cst_25 = arith.constant dense<0.000000e+00> : vector<256xf32>
    %57 = vector.multi_reduction <add>, %56, %cst_25 [0] : vector<3x256xf32> to vector<256xf32>
    %58 = vector.shape_cast %57 : vector<256xf32> to vector<1x256xf32>
    %cst_26 = arith.constant 5.000000e-01 : f32
    %59 = vector.broadcast %cst_26 : f32 to vector<1x256xf32>
    %60 = arith.mulf %58, %59 : vector<1x256xf32>
    %61 = math.sqrt %60 : vector<1x256xf32>
    %62 = tpu.iota {dimensions = array<i32: 0>} : vector<16x1xi32>
    %63 = arith.sitofp %62 : vector<16x1xi32> to vector<16x1xf32>
    %cst_27 = arith.constant 1.500000e+01 : f32
    %64 = vector.broadcast %cst_27 : f32 to vector<16x1xf32>
    %65 = arith.divf %63, %64 : vector<16x1xf32>
    %66 = math.tanh %53 : vector<1x256xf32>
    %cst_28 = arith.constant 0.000000e+00 : f32
    %cst_29 = arith.constant 1.000000e+00 : f32
    %67 = vector.broadcast %cst_28 : f32 to vector<1x256xf32>
    %68 = arith.maximumf %67, %66 : vector<1x256xf32>
    %69 = vector.broadcast %cst_29 : f32 to vector<1x256xf32>
    %70 = arith.minimumf %69, %68 : vector<1x256xf32>
    %71 = vector.broadcast %70 : vector<1x256xf32> to vector<16x256xf32>
    %72 = vector.broadcast %65 : vector<16x1xf32> to vector<16x256xf32>
    %73 = arith.subf %71, %72 : vector<16x256xf32>
    %74 = math.absf %73 : vector<16x256xf32>
    %cst_30 = arith.constant 1.500000e+01 : f32
    %75 = vector.broadcast %cst_30 : f32 to vector<16x256xf32>
    %76 = arith.mulf %74, %75 : vector<16x256xf32>
    %cst_31 = arith.constant 1.000000e+00 : f32
    %77 = vector.broadcast %cst_31 : f32 to vector<16x256xf32>
    %78 = arith.subf %77, %76 : vector<16x256xf32>
    %cst_32 = arith.constant 0.000000e+00 : f32
    %79 = vector.broadcast %cst_32 : f32 to vector<16x256xf32>
    %80 = arith.maximumf %78, %79 : vector<16x256xf32>
    %81 = math.tanh %61 : vector<1x256xf32>
    %cst_33 = arith.constant 0.000000e+00 : f32
    %cst_34 = arith.constant 1.000000e+00 : f32
    %82 = vector.broadcast %cst_33 : f32 to vector<1x256xf32>
    %83 = arith.maximumf %82, %81 : vector<1x256xf32>
    %84 = vector.broadcast %cst_34 : f32 to vector<1x256xf32>
    %85 = arith.minimumf %84, %83 : vector<1x256xf32>
    %86 = vector.broadcast %85 : vector<1x256xf32> to vector<16x256xf32>
    %87 = vector.broadcast %65 : vector<16x1xf32> to vector<16x256xf32>
    %88 = arith.subf %86, %87 : vector<16x256xf32>
    %89 = math.absf %88 : vector<16x256xf32>
    %cst_35 = arith.constant 1.500000e+01 : f32
    %90 = vector.broadcast %cst_35 : f32 to vector<16x256xf32>
    %91 = arith.mulf %89, %90 : vector<16x256xf32>
    %cst_36 = arith.constant 1.000000e+00 : f32
    %92 = vector.broadcast %cst_36 : f32 to vector<16x256xf32>
    %93 = arith.subf %92, %91 : vector<16x256xf32>
    %cst_37 = arith.constant 0.000000e+00 : f32
    %94 = vector.broadcast %cst_37 : f32 to vector<16x256xf32>
    %95 = arith.maximumf %93, %94 : vector<16x256xf32>
    %96 = tpu.concatenate %80, %95 in 0 : vector<16x256xf32>, vector<16x256xf32> -> vector<32x256xf32>
    %c0_38 = arith.constant 0 : index
    %c0_39 = arith.constant 0 : index
    %97 = vector.load %arg8[%c0_38, %c0_39] : memref<64x32xf32, #tpu.memory_space<vmem>>, vector<64x32xf32>
    %cst_40 = arith.constant dense<0.000000e+00> : vector<64x256xf32>
    %98 = tpu.matmul %97, %96, %cst_40 {dimension_numbers = #tpu.dot_dimension_numbers<[1], [0], [0], [1], [0, 0, 1, 1], [], []>} : vector<64x32xf32>, vector<32x256xf32>, vector<64x256xf32> -> vector<64x256xf32>
    %c0_41 = arith.constant 0 : index
    %c0_42 = arith.constant 0 : index
    %99 = vector.load %arg9[%c0_41, %c0_42] : memref<64x1xf32, #tpu.memory_space<vmem>>, vector<64x1xf32>
    %100 = vector.broadcast %99 : vector<64x1xf32> to vector<64x256xf32>
    %101 = arith.addf %98, %100 : vector<64x256xf32>
    %cst_43 = arith.constant 0.000000e+00 : f32
    %102 = vector.broadcast %cst_43 : f32 to vector<64x256xf32>
    %103 = arith.maximumf %101, %102 : vector<64x256xf32>
    %c0_44 = arith.constant 0 : index
    %c0_45 = arith.constant 0 : index
    %104 = vector.load %arg10[%c0_44, %c0_45] : memref<1x64xf32, #tpu.memory_space<vmem>>, vector<1x64xf32>
    %cst_46 = arith.constant dense<0.000000e+00> : vector<1x256xf32>
    %105 = tpu.matmul %104, %103, %cst_46 {dimension_numbers = #tpu.dot_dimension_numbers<[1], [0], [0], [1], [0, 0, 1, 1], [], []>} : vector<1x64xf32>, vector<64x256xf32>, vector<1x256xf32> -> vector<1x256xf32>
    %106 = vector.broadcast %1 : f32 to vector<1x256xf32>
    %107 = arith.addf %105, %106 : vector<1x256xf32>
    %108 = arith.mulf %107, %53 : vector<1x256xf32>
    %cst_47 = arith.constant 2.000000e+01 : f32
    %109 = vector.broadcast %cst_47 : f32 to vector<1x256xf32>
    %110 = arith.cmpf ogt, %108, %109 : vector<1x256xf32>
    %cst_48 = arith.constant 2.000000e+01 : f32
    %111 = vector.broadcast %cst_48 : f32 to vector<1x256xf32>
    %112 = arith.minimumf %108, %111 : vector<1x256xf32>
    %113 = math.exp %112 : vector<1x256xf32>
    %114 = math.log1p %113 : vector<1x256xf32>
    %115 = arith.select %110, %108, %114 : vector<1x256xi1>, vector<1x256xf32>
    %c0_49 = arith.constant 0 : index
    %c0_50 = arith.constant 0 : index
    %c0_51 = arith.constant 0 : index
    %116 = vector.load %arg5[%c0_49, %c0_50, %c0_51] : memref<1x1x256xf32, #tpu.memory_space<vmem>>, vector<1x1x256xf32>
    %117 = vector.shape_cast %116 : vector<1x1x256xf32> to vector<1x256xf32>
    %118 = arith.subf %117, %115 : vector<1x256xf32>
    %c0_52 = arith.constant 0 : index
    %c0_53 = arith.constant 0 : index
    %c0_54 = arith.constant 0 : index
    %119 = vector.load %arg11[%c0_52, %c0_53, %c0_54] : memref<1x1x256xf32, #tpu.memory_space<vmem>>, vector<1x1x256xf32>
    %120 = vector.shape_cast %119 : vector<1x1x256xf32> to vector<1x256xf32>
    %121 = vector.shape_cast %118 : vector<1x256xf32> to vector<1x1x256xf32>
    tpu.vector_store %arg11[%c0_52, %c0_53, %c0_54], %121 {strides = array<i32>} : memref<1x1x256xf32, #tpu.memory_space<vmem>>, vector<1x1x256xf32>,
    return
  }
  func.func @transform_0(%arg0: i32) -> i32 {
    %c0_i32 = arith.constant 0 : i32
    %c0_i32_0 = arith.constant 0 : i32
    return %c0_i32 : i32
  }
  func.func @transform_1(%arg0: i32) -> (i32, i32, i32, i32) {
    %c0_i32 = arith.constant 0 : i32
    %c0_i32_0 = arith.constant 0 : i32
    %c0_i32_1 = arith.constant 0 : i32
    %c0_i32_2 = arith.constant 0 : i32
    return %arg0, %c0_i32, %c0_i32_0, %c0_i32_1 : i32, i32, i32, i32
  }
  func.func @transform_2(%arg0: i32) -> (i32, i32, i32) {
    %c0_i32 = arith.constant 0 : i32
    %c0_i32_0 = arith.constant 0 : i32
    %c0_i32_1 = arith.constant 0 : i32
    return %arg0, %c0_i32, %c0_i32_0 : i32, i32, i32
  }
  func.func @transform_3(%arg0: i32) -> (i32, i32, i32) {
    %c0_i32 = arith.constant 0 : i32
    %c0_i32_0 = arith.constant 0 : i32
    %c0_i32_1 = arith.constant 0 : i32
    return %arg0, %c0_i32, %c0_i32_0 : i32, i32, i32
  }
  func.func @transform_4(%arg0: i32) -> (i32, i32, i32) {
    %c0_i32 = arith.constant 0 : i32
    %c0_i32_0 = arith.constant 0 : i32
    %c0_i32_1 = arith.constant 0 : i32
    return %arg0, %c0_i32, %c0_i32_0 : i32, i32, i32
  }
  func.func @transform_5(%arg0: i32) -> (i32, i32) {
    %c0_i32 = arith.constant 0 : i32
    %c0_i32_0 = arith.constant 0 : i32
    %c0_i32_1 = arith.constant 0 : i32
    return %c0_i32, %c0_i32_0 : i32, i32
  }
  func.func @transform_6(%arg0: i32) -> (i32, i32) {
    %c0_i32 = arith.constant 0 : i32
    %c0_i32_0 = arith.constant 0 : i32
    %c0_i32_1 = arith.constant 0 : i32
    return %c0_i32, %c0_i32_0 : i32, i32
  }
  func.func @transform_7(%arg0: i32) -> (i32, i32) {
    %c0_i32 = arith.constant 0 : i32
    %c0_i32_0 = arith.constant 0 : i32
    %c0_i32_1 = arith.constant 0 : i32
    return %c0_i32, %c0_i32_0 : i32, i32
  }
  func.func @transform_8(%arg0: i32) -> (i32, i32) {
    %c0_i32 = arith.constant 0 : i32
    %c0_i32_0 = arith.constant 0 : i32
    %c0_i32_1 = arith.constant 0 : i32
    return %c0_i32, %c0_i32_0 : i32, i32
  }
  func.func @transform_9(%arg0: i32) -> (i32, i32) {
    %c0_i32 = arith.constant 0 : i32
    %c0_i32_0 = arith.constant 0 : i32
    %c0_i32_1 = arith.constant 0 : i32
    return %c0_i32, %c0_i32_0 : i32, i32
  }
  func.func @transform_10(%arg0: i32) -> (i32, i32, i32) {
    %c0_i32 = arith.constant 0 : i32
    %c0_i32_0 = arith.constant 0 : i32
    %c0_i32_1 = arith.constant 0 : i32
    return %arg0, %c0_i32, %c0_i32_0 : i32, i32, i32
  }
}

</mosaic_0001>

<llo_original>
// kernel: attention_learn_score_scaling_forward.1
$region0: #{attention_learn_score_scaling_forward.1}
  #allocation0 [shape = 'u32[]', space=smem, size = 0x4, offset = 0x4, fixed_abs, tag = 'smem constant byte address 0x4 - core index']
  #allocation1 [shape = 'u32[144,128]{1,0:T(1,128)}', space=vmem, size = 0x12000, scoped, tag = 'internal scratch']
  %s0 = inlined_call_operand.vmem [shape: f32[2], index: 0, kind: input, shape index: {}]
  %s1 = inlined_call_operand.vmem [shape: f32[2,3,64,16], index: 1, kind: input, shape index: {}]
  %s2 = inlined_call_operand.vmem [shape: f32[2,64,16], index: 2, kind: input, shape index: {}]
  %s3 = inlined_call_operand.vmem [shape: f32[2,3,256], index: 3, kind: input, shape index: {}]
  %s4 = inlined_call_operand.vmem [shape: f32[2,1,256], index: 4, kind: input, shape index: {}]
  %s5 = inlined_call_operand.vmem [shape: f32[256,64], index: 5, kind: input, shape index: {}]
  %s6 = inlined_call_operand.vmem [shape: f32[64,256], index: 6, kind: input, shape index: {}]
  %s7 = inlined_call_operand.vmem [shape: f32[64,32], index: 7, kind: input, shape index: {}]
  %s8 = inlined_call_operand.vmem [shape: f32[64,1], index: 8, kind: input, shape index: {}]
  %s9 = inlined_call_operand.vmem [shape: f32[1,64], index: 9, kind: input, shape index: {}]
  %s10 = inlined_call_operand.vmem [shape: f32[2,1,256], index: 10, kind: output, shape index: {}]
  %s11 = sld [smem:[#allocation0]]
  $region77: #{attention_learn_score_scaling_forward.1} parent=0
    _
  %s13 = ssub.s32 1, %s11
  %s14 = scalar_select 0, %s13, %s11
  $region1: #{attention_learn_score_scaling_forward.1} parent=0
    #allocation2 [shape = 'u8[512]{0}', space=smem, size = 0x200, scoped, tag = 'input window, operand 0, single buffered']
    #allocation3 [shape = 's32[2]{0}', space=sflag, size = 0x8, scoped, tag = 'scoped memory for attention_learn_score_scaling_forward.1']
    %15 = vsyncpa [#allocation3], 0
    loop: start=0, step=1, limit=4
    $region2: #{attention_learn_score_scaling_forward.1} parent=1 // loop_pre_header
      _
    $region3: #{attention_learn_score_scaling_forward.1} parent=1 // loop_header
      %s17 = sphi 0, %s21
      %p18 = scmp.ge.s32.totalorder %s17, 4
      %s25 = sphi 0, %s25
      %s27 = sphi 0, %s25
      %s28 = sphi 0, %s27
      %s42 = sphi 0, %s28
      %s48 = sphi 0, %s50
      %s51 = sphi 0, %s48
      %s52 = sphi 0, %s51
      %s68 = sphi 0, %s52
      %s74 = sphi 0, %s76
      %s77 = sphi 0, %s74
      %s78 = sphi 0, %s77
      %s94 = sphi 0, %s78
      %s100 = sphi 0, %s102
      %s103 = sphi 0, %s100
      %s104 = sphi 0, %s103
      %s120 = sphi 0, %s104
      %s126 = sphi 0, %s128
      %s129 = sphi 0, %s126
      %s130 = sphi 0, %s129
      %s146 = sphi 0, %s130
      %s150 = sphi 0, %s150
      %s152 = sphi 0, %s150
      %s153 = sphi 0, %s152
      %s167 = sphi 0, %s153
      %s171 = sphi 0, %s171
      %s173 = sphi 0, %s171
      %s174 = sphi 0, %s173
      %s188 = sphi 0, %s174
      %s192 = sphi 0, %s192
      %s194 = sphi 0, %s192
      %s195 = sphi 0, %s194
      %s209 = sphi 0, %s195
      %s213 = sphi 0, %s213
      %s215 = sphi 0, %s213
      %s216 = sphi 0, %s215
      %s230 = sphi 0, %s216
      %s234 = sphi 0, %s234
      %s236 = sphi 0, %s234
      %s237 = sphi 0, %s236
      %s251 = sphi 0, %s237
      %s257 = sphi 0, %s259
      %s260 = sphi 0, %s257
      %s261 = sphi 0, %s260
      %s277 = sphi 0, %s261
    $region4: #{attention_learn_score_scaling_forward.1} parent=1 // loop_header_branch
      %20 = sbr.rel (%p18) target = $region8
    $region5: #{attention_learn_score_scaling_forward.1} parent=1 // loop_body
      %s22 = ssub.s32 %s17, 1
      %s23 = ssub.s32 %s17, 2
      %s24 = sadd.s32 %s17, 1
      %s26 = sadd.s32 %s25, 1
      %p29 = scmp.eq.s32.totalorder %s17, 1
      %p30 = scmp.ne.s32.totalorder %s25, %s27
      %p31 = scmp.eq.s32.totalorder %s17, 0
      %p32 = por %p30, %p31
      %p33 = scmp.ne.s32.totalorder %s25, %s27
      %p34 = scmp.eq.s32.totalorder %s22, 1
      %p35 = por %p33, %p34
      %p36 = scmp.ne.s32.totalorder %s27, %s28
      %p37 = scmp.eq.s32.totalorder %s22, 0
      %p38 = por %p36, %p37
      %p39 = scmp.ne.s32.totalorder %s27, %s28
      %p40 = scmp.eq.s32.totalorder %s23, 1
      %p41 = por %p39, %p40
      %p43 = scmp.ne.s32.totalorder %s28, %s42
      %p44 = scmp.eq.s32.totalorder %s23, 0
      %p45 = por %p43, %p44
      %s46 = ssub.s32 %s17, %s24
      %p47 = scmp.eq.s32.totalorder %s46, 0
      %s49 = sadd.s32 %s48, 1
      %s50 = scalar_select %p47, %s48, %s49
      %p53 = pneg %p47
      %p54 = scmp.eq.s32.totalorder %s17, 1
      %p55 = por %p53, %p54
      %p56 = scmp.ne.s32.totalorder %s48, %s51
      %p57 = scmp.eq.s32.totalorder %s17, 0
      %p58 = por %p56, %p57
      %p59 = scmp.ne.s32.totalorder %s48, %s51
      %p60 = scmp.eq.s32.totalorder %s22, 1
      %p61 = por %p59, %p60
      %p62 = scmp.ne.s32.totalorder %s51, %s52
      %p63 = scmp.eq.s32.totalorder %s22, 0
      %p64 = por %p62, %p63
      %p65 = scmp.ne.s32.totalorder %s51, %s52
      %p66 = scmp.eq.s32.totalorder %s23, 1
      %p67 = por %p65, %p66
      %p69 = scmp.ne.s32.totalorder %s52, %s68
      %p70 = scmp.eq.s32.totalorder %s23, 0
      %p71 = por %p69, %p70
      %s72 = ssub.s32 %s17, %s24
      %p73 = scmp.eq.s32.totalorder %s72, 0
      %s75 = sadd.s32 %s74, 1
      %s76 = scalar_select %p73, %s74, %s75
      %p79 = pneg %p73
      %p80 = scmp.eq.s32.totalorder %s17, 1
      %p81 = por %p79, %p80
      %p82 = scmp.ne.s32.totalorder %s74, %s77
      %p83 = scmp.eq.s32.totalorder %s17, 0
      %p84 = por %p82, %p83
      %p85 = scmp.ne.s32.totalorder %s74, %s77
      %p86 = scmp.eq.s32.totalorder %s22, 1
      %p87 = por %p85, %p86
      %p88 = scmp.ne.s32.totalorder %s77, %s78
      %p89 = scmp.eq.s32.totalorder %s22, 0
      %p90 = por %p88, %p89
      %p91 = scmp.ne.s32.totalorder %s77, %s78
      %p92 = scmp.eq.s32.totalorder %s23, 1
      %p93 = por %p91, %p92
      %p95 = scmp.ne.s32.totalorder %s78, %s94
      %p96 = scmp.eq.s32.totalorder %s23, 0
      %p97 = por %p95, %p96
      %s98 = ssub.s32 %s17, %s24
      %p99 = scmp.eq.s32.totalorder %s98, 0
      %s101 = sadd.s32 %s100, 1
      %s102 = scalar_select %p99, %s100, %s101
      %p105 = pneg %p99
      %p106 = scmp.eq.s32.totalorder %s17, 1
      %p107 = por %p105, %p106
      %p108 = scmp.ne.s32.totalorder %s100, %s103
      %p109 = scmp.eq.s32.totalorder %s17, 0
      %p110 = por %p108, %p109
      %p111 = scmp.ne.s32.totalorder %s100, %s103
      %p112 = scmp.eq.s32.totalorder %s22, 1
      %p113 = por %p111, %p112
      %p114 = scmp.ne.s32.totalorder %s103, %s104
      %p115 = scmp.eq.s32.totalorder %s22, 0
      %p116 = por %p114, %p115
      %p117 = scmp.ne.s32.totalorder %s103, %s104
      %p118 = scmp.eq.s32.totalorder %s23, 1
      %p119 = por %p117, %p118
      %p121 = scmp.ne.s32.totalorder %s104, %s120
      %p122 = scmp.eq.s32.totalorder %s23, 0
      %p123 = por %p121, %p122
      %s124 = ssub.s32 %s17, %s24
      %p125 = scmp.eq.s32.totalorder %s124, 0
      %s127 = sadd.s32 %s126, 1
      %s128 = scalar_select %p125, %s126, %s127
      %p131 = pneg %p125
      %p132 = scmp.eq.s32.totalorder %s17, 1
      %p133 = por %p131, %p132
      %p134 = scmp.ne.s32.totalorder %s126, %s129
      %p135 = scmp.eq.s32.totalorder %s17, 0
      %p136 = por %p134, %p135
      %p137 = scmp.ne.s32.totalorder %s126, %s129
      %p138 = scmp.eq.s32.totalorder %s22, 1
      %p139 = por %p137, %p138
      %p140 = scmp.ne.s32.totalorder %s129, %s130
      %p141 = scmp.eq.s32.totalorder %s22, 0
      %p142 = por %p140, %p141
      %p143 = scmp.ne.s32.totalorder %s129, %s130
      %p144 = scmp.eq.s32.totalorder %s23, 1
      %p145 = por %p143, %p144
      %p147 = scmp.ne.s32.totalorder %s130, %s146
      %p148 = scmp.eq.s32.totalorder %s23, 0
      %p149 = por %p147, %p148
      %s151 = sadd.s32 %s150, 1
      %p154 = scmp.eq.s32.totalorder %s17, 1
      %p155 = scmp.ne.s32.totalorder %s150, %s152
      %p156 = scmp.eq.s32.totalorder %s17, 0
      %p157 = por %p155, %p156
      %p158 = scmp.ne.s32.totalorder %s150, %s152
      %p159 = scmp.eq.s32.totalorder %s22, 1
      %p160 = por %p158, %p159
      %p161 = scmp.ne.s32.totalorder %s152, %s153
      %p162 = scmp.eq.s32.totalorder %s22, 0
      %p163 = por %p161, %p162
      %p164 = scmp.ne.s32.totalorder %s152, %s153
      %p165 = scmp.eq.s32.totalorder %s23, 1
      %p166 = por %p164, %p165
      %p168 = scmp.ne.s32.totalorder %s153, %s167
      %p169 = scmp.eq.s32.totalorder %s23, 0
      %p170 = por %p168, %p169
      %s172 = sadd.s32 %s171, 1
      %p175 = scmp.eq.s32.totalorder %s17, 1
      %p176 = scmp.ne.s32.totalorder %s171, %s173
      %p177 = scmp.eq.s32.totalorder %s17, 0
      %p178 = por %p176, %p177
      %p179 = scmp.ne.s32.totalorder %s171, %s173
      %p180 = scmp.eq.s32.totalorder %s22, 1
      %p181 = por %p179, %p180
      %p182 = scmp.ne.s32.totalorder %s173, %s174
      %p183 = scmp.eq.s32.totalorder %s22, 0
      %p184 = por %p182, %p183
      %p185 = scmp.ne.s32.totalorder %s173, %s174
      %p186 = scmp.eq.s32.totalorder %s23, 1
      %p187 = por %p185, %p186
      %p189 = scmp.ne.s32.totalorder %s174, %s188
      %p190 = scmp.eq.s32.totalorder %s23, 0
      %p191 = por %p189, %p190
      %s193 = sadd.s32 %s192, 1
      %p196 = scmp.eq.s32.totalorder %s17, 1
      %p197 = scmp.ne.s32.totalorder %s192, %s194
      %p198 = scmp.eq.s32.totalorder %s17, 0
      %p199 = por %p197, %p198
      %p200 = scmp.ne.s32.totalorder %s192, %s194
      %p201 = scmp.eq.s32.totalorder %s22, 1
      %p202 = por %p200, %p201
      %p203 = scmp.ne.s32.totalorder %s194, %s195
      %p204 = scmp.eq.s32.totalorder %s22, 0
      %p205 = por %p203, %p204
      %p206 = scmp.ne.s32.totalorder %s194, %s195
      %p207 = scmp.eq.s32.totalorder %s23, 1
      %p208 = por %p206, %p207
      %p210 = scmp.ne.s32.totalorder %s195, %s209
      %p211 = scmp.eq.s32.totalorder %s23, 0
      %p212 = por %p210, %p211
      %s214 = sadd.s32 %s213, 1
      %p217 = scmp.eq.s32.totalorder %s17, 1
      %p218 = scmp.ne.s32.totalorder %s213, %s215
      %p219 = scmp.eq.s32.totalorder %s17, 0
      %p220 = por %p218, %p219
      %p221 = scmp.ne.s32.totalorder %s213, %s215
      %p222 = scmp.eq.s32.totalorder %s22, 1
      %p223 = por %p221, %p222
      %p224 = scmp.ne.s32.totalorder %s215, %s216
      %p225 = scmp.eq.s32.totalorder %s22, 0
      %p226 = por %p224, %p225
      %p227 = scmp.ne.s32.totalorder %s215, %s216
      %p228 = scmp.eq.s32.totalorder %s23, 1
      %p229 = por %p227, %p228
      %p231 = scmp.ne.s32.totalorder %s216, %s230
      %p232 = scmp.eq.s32.totalorder %s23, 0
      %p233 = por %p231, %p232
      %s235 = sadd.s32 %s234, 1
      %p238 = scmp.eq.s32.totalorder %s17, 1
      %p239 = scmp.ne.s32.totalorder %s234, %s236
      %p240 = scmp.eq.s32.totalorder %s17, 0
      %p241 = por %p239, %p240
      %p242 = scmp.ne.s32.totalorder %s234, %s236
      %p243 = scmp.eq.s32.totalorder %s22, 1
      %p244 = por %p242, %p243
      %p245 = scmp.ne.s32.totalorder %s236, %s237
      %p246 = scmp.eq.s32.totalorder %s22, 0
      %p247 = por %p245, %p246
      %p248 = scmp.ne.s32.totalorder %s236, %s237
      %p249 = scmp.eq.s32.totalorder %s23, 1
      %p250 = por %p248, %p249
      %p252 = scmp.ne.s32.totalorder %s237, %s251
      %p253 = scmp.eq.s32.totalorder %s23, 0
      %p254 = por %p252, %p253
      %s255 = ssub.s32 %s17, %s24
      %p256 = scmp.eq.s32.totalorder %s255, 0
      %s258 = sadd.s32 %s257, 1
      %s259 = scalar_select %p256, %s257, %s258
      %p262 = pneg %p256
      %p263 = scmp.eq.s32.totalorder %s17, 1
      %p264 = por %p262, %p263
      %p265 = scmp.ne.s32.totalorder %s257, %s260
      %p266 = scmp.eq.s32.totalorder %s17, 0
      %p267 = por %p265, %p266
      %p268 = scmp.ne.s32.totalorder %s257, %s260
      %p269 = scmp.eq.s32.totalorder %s22, 1
      %p270 = por %p268, %p269
      %p271 = scmp.ne.s32.totalorder %s260, %s261
      %p272 = scmp.eq.s32.totalorder %s22, 0
      %p273 = por %p271, %p272
      %p274 = scmp.ne.s32.totalorder %s260, %s261
      %p275 = scmp.eq.s32.totalorder %s23, 1
      %p276 = por %p274, %p275
      %p278 = scmp.ne.s32.totalorder %s261, %s277
      %p279 = scmp.eq.s32.totalorder %s23, 0
      %p280 = por %p278, %p279
      %p281 = scmp.le.s32.totalorder 1, %s17
      %p282 = scmp.lt.s32.totalorder %s17, 3
      %p283 = pnand %p281, %p282
      %p284 = pneg %p283
      // Predicated region
      $region9: #{attention_learn_score_scaling_forward.1} parent=5 // pred_check
        _
      $region10: #{attention_learn_score_scaling_forward.1} parent=5 // pred_check_branch
        %286 = sbr.rel (%p283) target = $region12
      $region11: #{attention_learn_score_scaling_forward.1} parent=5 // pred_region
        %s287 = ssub.s32 %s17, 1
        // Predicated region
        $region13: #{attention_learn_score_scaling_forward.1} parent=11 // pred_check
          %p288 = pneg %p38
        $region14: #{attention_learn_score_scaling_forward.1} parent=11 // pred_check_branch
          %290 = sbr.rel (%p288) target = $region16
        $region15: #{attention_learn_score_scaling_forward.1} parent=11 // pred_region
          %s292 = ssub.s32 16, 16
          %293 = vsyncadd [#allocation3], %s292
          %s295 = sshll.u32 %s0, 4
          %s296 = int_to_ptr.vmem [resolvable:$true] %s295
          %298 = dma.vmem_to_smem %s296, 16, [#allocation2], [#allocation3]
        $region16: #{attention_learn_score_scaling_forward.1} parent=11 // pred_fallthru
          _
        // Predicated region
        $region17: #{attention_learn_score_scaling_forward.1} parent=11 // pred_check
          %p299 = pneg %p163
        $region18: #{attention_learn_score_scaling_forward.1} parent=11 // pred_check_branch
          %301 = sbr.rel (%p299) target = $region20
        $region19: #{attention_learn_score_scaling_forward.1} parent=11 // pred_region
          _
        $region20: #{attention_learn_score_scaling_forward.1} parent=11 // pred_fallthru
          _
        // Predicated region
        $region21: #{attention_learn_score_scaling_forward.1} parent=11 // pred_check
          %p302 = pneg %p184
        $region22: #{attention_learn_score_scaling_forward.1} parent=11 // pred_check_branch
          %304 = sbr.rel (%p302) target = $region24
        $region23: #{attention_learn_score_scaling_forward.1} parent=11 // pred_region
          _
        $region24: #{attention_learn_score_scaling_forward.1} parent=11 // pred_fallthru
          _
        // Predicated region
        $region25: #{attention_learn_score_scaling_forward.1} parent=11 // pred_check
          %p305 = pneg %p205
        $region26: #{attention_learn_score_scaling_forward.1} parent=11 // pred_check_branch
          %307 = sbr.rel (%p305) target = $region28
        $region27: #{attention_learn_score_scaling_forward.1} parent=11 // pred_region
          _
        $region28: #{attention_learn_score_scaling_forward.1} parent=11 // pred_fallthru
          _
        // Predicated region
        $region29: #{attention_learn_score_scaling_forward.1} parent=11 // pred_check
          %p308 = pneg %p226
        $region30: #{attention_learn_score_scaling_forward.1} parent=11 // pred_check_branch
          %310 = sbr.rel (%p308) target = $region32
        $region31: #{attention_learn_score_scaling_forward.1} parent=11 // pred_region
          _
        $region32: #{attention_learn_score_scaling_forward.1} parent=11 // pred_fallthru
          _
        // Predicated region
        $region33: #{attention_learn_score_scaling_forward.1} parent=11 // pred_check
          %p311 = pneg %p247
        $region34: #{attention_learn_score_scaling_forward.1} parent=11 // pred_check_branch
          %313 = sbr.rel (%p311) target = $region36
        $region35: #{attention_learn_score_scaling_forward.1} parent=11 // pred_region
          _
        $region36: #{attention_learn_score_scaling_forward.1} parent=11 // pred_fallthru
          _
      $region12: #{attention_learn_score_scaling_forward.1} parent=5 // pred_fallthru
        _
      %p314 = scmp.lt.s32.totalorder %s17, 2
      // Predicated region
      $region37: #{attention_learn_score_scaling_forward.1} parent=5 // pred_check
        %p315 = pneg %p314
      $region38: #{attention_learn_score_scaling_forward.1} parent=5 // pred_check_branch
        %317 = sbr.rel (%p315) target = $region40
      $region39: #{attention_learn_score_scaling_forward.1} parent=5 // pred_region
        // Predicated region
        $region41: #{attention_learn_score_scaling_forward.1} parent=39 // pred_check
          %p318 = pneg %p58
        $region42: #{attention_learn_score_scaling_forward.1} parent=39 // pred_check_branch
          %320 = sbr.rel (%p318) target = $region44
        $region43: #{attention_learn_score_scaling_forward.1} parent=39 // pred_region
          %p321 = scmp.lt.s32.totalorder %s17, 1
          %s322 = scalar_select %p321, %s17, 1
          %s323 = smul.addr %s322, 24
          %s324 = smul.addr %s323, 8
          %s325 = scalar_lea.vmem %s1, %s324
        $region44: #{attention_learn_score_scaling_forward.1} parent=39 // pred_fallthru
          _
        // Predicated region
        $region45: #{attention_learn_score_scaling_forward.1} parent=39 // pred_check
          %p326 = pneg %p84
        $region46: #{attention_learn_score_scaling_forward.1} parent=39 // pred_check_branch
          %328 = sbr.rel (%p326) target = $region48
        $region47: #{attention_learn_score_scaling_forward.1} parent=39 // pred_region
          %p329 = scmp.lt.s32.totalorder %s17, 1
          %s330 = scalar_select %p329, %s17, 1
          %s331 = smul.addr %s330, 8
          %s332 = smul.addr %s331, 8
          %s333 = scalar_lea.vmem %s2, %s332
        $region48: #{attention_learn_score_scaling_forward.1} parent=39 // pred_fallthru
          _
        // Predicated region
        $region49: #{attention_learn_score_scaling_forward.1} parent=39 // pred_check
          %p334 = pneg %p110
        $region50: #{attention_learn_score_scaling_forward.1} parent=39 // pred_check_branch
          %336 = sbr.rel (%p334) target = $region52
        $region51: #{attention_learn_score_scaling_forward.1} parent=39 // pred_region
          %p337 = scmp.lt.s32.totalorder %s17, 1
          %s338 = scalar_select %p337, %s17, 1
          %s339 = smul.addr %s338, 2
          %s340 = smul.addr %s339, 4
          %s341 = scalar_lea.vmem %s3, %s340
        $region52: #{attention_learn_score_scaling_forward.1} parent=39 // pred_fallthru
          _
        // Predicated region
        $region53: #{attention_learn_score_scaling_forward.1} parent=39 // pred_check
          %p342 = pneg %p136
        $region54: #{attention_learn_score_scaling_forward.1} parent=39 // pred_check_branch
          %344 = sbr.rel (%p342) target = $region56
        $region55: #{attention_learn_score_scaling_forward.1} parent=39 // pred_region
          %p345 = scmp.lt.s32.totalorder %s17, 1
          %s346 = scalar_select %p345, %s17, 1
          %s347 = smul.addr %s346, 2
          %s348 = scalar_lea.vmem %s4, %s347
        $region56: #{attention_learn_score_scaling_forward.1} parent=39 // pred_fallthru
          _
      $region40: #{attention_learn_score_scaling_forward.1} parent=5 // pred_fallthru
        _
      %p349 = scmp.le.s32.totalorder 1, %s17
      %p350 = scmp.lt.s32.totalorder %s17, 3
      %p351 = pnand %p349, %p350
      %p352 = pneg %p351
      // Predicated region
      $region57: #{attention_learn_score_scaling_forward.1} parent=5 // pred_check
        _
      $region58: #{attention_learn_score_scaling_forward.1} parent=5 // pred_check_branch
        %354 = sbr.rel (%p351) target = $region60
      $region59: #{attention_learn_score_scaling_forward.1} parent=5 // pred_region
        %s355 = ssub.s32 %s17, 1
        // Predicated region
        $region61: #{attention_learn_score_scaling_forward.1} parent=59 // pred_check
          %p356 = pneg %p38
        $region62: #{attention_learn_score_scaling_forward.1} parent=59 // pred_check_branch
          %358 = sbr.rel (%p356) target = $region64
        $region63: #{attention_learn_score_scaling_forward.1} parent=59 // pred_region
          %359 = dma.done [#allocation3], 16
        $region64: #{attention_learn_score_scaling_forward.1} parent=59 // pred_fallthru
          _
        %360 = sfence
        %p361 = pneg %p38
        %p362 = pneg %p35
        %p363 = scmp.lt.s32.totalorder %s22, 1
        %s364 = scalar_select %p363, %s22, 1
        %s365 = smul.addr %s364, 24
        %s366 = smul.addr %s365, 8
        %s367 = scalar_lea.vmem %s1, %s366
        %p368 = pneg %p64
        %p369 = pneg %p61
        %p370 = scmp.lt.s32.totalorder %s22, 1
        %s371 = scalar_select %p370, %s22, 1
        %s372 = smul.addr %s371, 8
        %s373 = smul.addr %s372, 8
        %s374 = scalar_lea.vmem %s2, %s373
        %p375 = pneg %p90
        %p376 = pneg %p87
        %p377 = scmp.lt.s32.totalorder %s22, 1
        %s378 = scalar_select %p377, %s22, 1
        %s379 = smul.addr %s378, 2
        %s380 = smul.addr %s379, 4
        %s381 = scalar_lea.vmem %s3, %s380
        %p382 = pneg %p116
        %p383 = pneg %p113
        %p384 = scmp.lt.s32.totalorder %s22, 1
        %s385 = scalar_select %p384, %s22, 1
        %s386 = smul.addr %s385, 2
        %s387 = scalar_lea.vmem %s4, %s386
        %p388 = pneg %p142
        %p389 = pneg %p139
        %p390 = pneg %p163
        %p391 = pneg %p160
        %p392 = pneg %p184
        %p393 = pneg %p181
        %p394 = pneg %p205
        %p395 = pneg %p202
        %p396 = pneg %p226
        %p397 = pneg %p223
        %p398 = pneg %p247
        %p399 = pneg %p244
        %p400 = pneg %p273
        %p401 = pneg %p270
        %p402 = scmp.lt.s32.totalorder %s22, 1
        %s403 = scalar_select %p402, %s22, 1
        %s404 = smul.addr %s403, 2
        %s405 = scalar_lea.vmem %s10, %s404
        %p406 = scmp.lt.s32.totalorder %s22, 1
        %s407 = scalar_select %p406, %s22, 1
        %s408 = smul.addr %s407, 24
        %s409 = smul.addr %s408, 8
        %s410 = scalar_lea.vmem %s1, %s409
        %p411 = scmp.lt.s32.totalorder %s22, 1
        %s412 = scalar_select %p411, %s22, 1
        %s413 = smul.addr %s412, 8
        %s414 = smul.addr %s413, 8
        %s415 = scalar_lea.vmem %s2, %s414
        %p416 = scmp.lt.s32.totalorder %s22, 1
        %s417 = scalar_select %p416, %s22, 1
        %s418 = smul.addr %s417, 2
        %s419 = smul.addr %s418, 4
        %s420 = scalar_lea.vmem %s3, %s419
        %p421 = scmp.lt.s32.totalorder %s22, 1
        %s422 = scalar_select %p421, %s22, 1
        %s423 = smul.addr %s422, 2
        %s424 = scalar_lea.vmem %s4, %s423
        %p425 = scmp.lt.s32.totalorder %s22, 1
        %s426 = scalar_select %p425, %s22, 1
        %s427 = smul.addr %s426, 2
        %s428 = scalar_lea.vmem %s10, %s427
        %s430 = sld [smem:[#allocation2]]
        %s431 = sld [smem:[#allocation2 + $0x1]]
        %v432 = vld [vmem:[%s410] sm:$0xff]
        %v433 = vld [vmem:[%s410 + $0x8] sm:$0xff]
        %v434 = vld [vmem:[%s410 + $0x10] sm:$0xff]
        %v435 = vld [vmem:[%s410 + $0x18] sm:$0xff]
        %v436 = vld [vmem:[%s410 + $0x20] sm:$0xff]
        %v437 = vld [vmem:[%s410 + $0x28] sm:$0xff]
        %v438 = vld [vmem:[%s410 + $0x30] sm:$0xff]
        %v439 = vld [vmem:[%s410 + $0x38] sm:$0xff]
        %v440 = vld [vmem:[%s410 + $0x40] sm:$0xff]
        %v441 = vld [vmem:[%s410 + $0x48] sm:$0xff]
        %v442 = vld [vmem:[%s410 + $0x50] sm:$0xff]
        %v443 = vld [vmem:[%s410 + $0x58] sm:$0xff]
        %v444 = vld [vmem:[%s410 + $0x60] sm:$0xff]
        %v445 = vld [vmem:[%s410 + $0x68] sm:$0xff]
        %v446 = vld [vmem:[%s410 + $0x70] sm:$0xff]
        %v447 = vld [vmem:[%s410 + $0x78] sm:$0xff]
        %v448 = vld [vmem:[%s410 + $0x80] sm:$0xff]
        %v449 = vld [vmem:[%s410 + $0x88] sm:$0xff]
        %v450 = vld [vmem:[%s410 + $0x90] sm:$0xff]
        %v451 = vld [vmem:[%s410 + $0x98] sm:$0xff]
        %v452 = vld [vmem:[%s410 + $0xa0] sm:$0xff]
        %v453 = vld [vmem:[%s410 + $0xa8] sm:$0xff]
        %v454 = vld [vmem:[%s410 + $0xb0] sm:$0xff]
        %v455 = vld [vmem:[%s410 + $0xb8] sm:$0xff]
        %v456 = vld [vmem:[%s415] sm:$0xff]
        %v457 = vld [vmem:[%s415 + $0x8] sm:$0xff]
        %v458 = vld [vmem:[%s415 + $0x10] sm:$0xff]
        %v459 = vld [vmem:[%s415 + $0x18] sm:$0xff]
        %v460 = vld [vmem:[%s415 + $0x20] sm:$0xff]
        %v461 = vld [vmem:[%s415 + $0x28] sm:$0xff]
        %v462 = vld [vmem:[%s415 + $0x30] sm:$0xff]
        %v463 = vld [vmem:[%s415 + $0x38] sm:$0xff]
        %v464 = vld [vmem:[%s420] sm:$0x77]
        %v465 = vld [vmem:[%s5] sm:$0xff]
        %v466 = vld [vmem:[%s5 + $0x8] sm:$0xff]
        %v467 = vld [vmem:[%s5 + $0x10] sm:$0xff]
        %v468 = vld [vmem:[%s5 + $0x18] sm:$0xff]
        %v469 = vld [vmem:[%s5 + $0x20] sm:$0xff]
        %v470 = vld [vmem:[%s5 + $0x28] sm:$0xff]
        %v471 = vld [vmem:[%s5 + $0x30] sm:$0xff]
        %v472 = vld [vmem:[%s5 + $0x38] sm:$0xff]
        %v473 = vld [vmem:[%s5 + $0x40] sm:$0xff]
        %v474 = vld [vmem:[%s5 + $0x48] sm:$0xff]
        %v475 = vld [vmem:[%s5 + $0x50] sm:$0xff]
        %v476 = vld [vmem:[%s5 + $0x58] sm:$0xff]
        %v477 = vld [vmem:[%s5 + $0x60] sm:$0xff]
        %v478 = vld [vmem:[%s5 + $0x68] sm:$0xff]
        %v479 = vld [vmem:[%s5 + $0x70] sm:$0xff]
        %v480 = vld [vmem:[%s5 + $0x78] sm:$0xff]
        %v481 = vld [vmem:[%s5 + $0x80] sm:$0xff]
        %v482 = vld [vmem:[%s5 + $0x88] sm:$0xff]
        %v483 = vld [vmem:[%s5 + $0x90] sm:$0xff]
        %v484 = vld [vmem:[%s5 + $0x98] sm:$0xff]
        %v485 = vld [vmem:[%s5 + $0xa0] sm:$0xff]
        %v486 = vld [vmem:[%s5 + $0xa8] sm:$0xff]
        %v487 = vld [vmem:[%s5 + $0xb0] sm:$0xff]
        %v488 = vld [vmem:[%s5 + $0xb8] sm:$0xff]
        %v489 = vld [vmem:[%s5 + $0xc0] sm:$0xff]
        %v490 = vld [vmem:[%s5 + $0xc8] sm:$0xff]
        %v491 = vld [vmem:[%s5 + $0xd0] sm:$0xff]
        %v492 = vld [vmem:[%s5 + $0xd8] sm:$0xff]
        %v493 = vld [vmem:[%s5 + $0xe0] sm:$0xff]
        %v494 = vld [vmem:[%s5 + $0xe8] sm:$0xff]
        %v495 = vld [vmem:[%s5 + $0xf0] sm:$0xff]
        %v496 = vld [vmem:[%s5 + $0xf8] sm:$0xff]
        %v498 = vcombine.high %v464, %v464
        %500 = vmatprep.subr.mxu0 0.0
        %501 = vmatpush1.msra.mxu0 %v480
        %502 = vmatprep.subr.mxu0 0.0
        %503 = vmatpush1.msra.mxu0 %v479
        %504 = vmatprep.subr.mxu0 0.0
        %505 = vmatpush1.msra.mxu0 %v478
        %506 = vmatprep.subr.mxu0 0.0
        %507 = vmatpush1.msra.mxu0 %v477
        %508 = vmatprep.subr.mxu0 0.0
        %509 = vmatpush1.msra.mxu0 %v476
        %510 = vmatprep.subr.mxu0 0.0
        %511 = vmatpush1.msra.mxu0 %v475
        %512 = vmatprep.subr.mxu0 0.0
        %513 = vmatpush1.msra.mxu0 %v474
        %514 = vmatprep.subr.mxu0 0.0
        %515 = vmatpush1.msra.mxu0 %v473
        %516 = vmatprep.subr.mxu0 0.0
        %517 = vmatpush1.msra.mxu0 %v472
        %518 = vmatprep.subr.mxu0 0.0
        %519 = vmatpush1.msra.mxu0 %v471
        %520 = vmatprep.subr.mxu0 0.0
        %521 = vmatpush1.msra.mxu0 %v470
        %522 = vmatprep.subr.mxu0 0.0
        %523 = vmatpush1.msra.mxu0 %v469
        %524 = vmatprep.subr.mxu0 0.0
        %525 = vmatpush1.msra.mxu0 %v468
        %526 = vmatprep.subr.mxu0 0.0
        %527 = vmatpush1.msra.mxu0 %v467
        %528 = vmatprep.subr.mxu0 0.0
        %529 = vmatpush1.msra.mxu0 %v466
        %530 = vmatprep.subr.mxu0 0.0
        %531 = vmatpush1.msra.mxu0 %v465
        %532 = vmatprep.subr.mxu0 0.0
        %533 = vmatpush2.msra.mxu0 %v496
        %534 = vmatprep.subr.mxu0 0.0
        %535 = vmatpush2.msra.mxu0 %v495
        %536 = vmatprep.subr.mxu0 0.0
        %537 = vmatpush2.msra.mxu0 %v494
        %538 = vmatprep.subr.mxu0 0.0
        %539 = vmatpush2.msra.mxu0 %v493
        %540 = vmatprep.subr.mxu0 0.0
        %541 = vmatpush2.msra.mxu0 %v492
        %542 = vmatprep.subr.mxu0 0.0
        %543 = vmatpush2.msra.mxu0 %v491
        %544 = vmatprep.subr.mxu0 0.0
        %545 = vmatpush2.msra.mxu0 %v490
        %546 = vmatprep.subr.mxu0 0.0
        %547 = vmatpush2.msra.mxu0 %v489
        %548 = vmatprep.subr.mxu0 0.0
        %549 = vmatpush2.msra.mxu0 %v488
        %550 = vmatprep.subr.mxu0 0.0
        %551 = vmatpush2.msra.mxu0 %v487
        %552 = vmatprep.subr.mxu0 0.0
        %553 = vmatpush2.msra.mxu0 %v486
        %554 = vmatprep.subr.mxu0 0.0
        %555 = vmatpush2.msra.mxu0 %v485
        %556 = vmatprep.subr.mxu0 0.0
        %557 = vmatpush2.msra.mxu0 %v484
        %558 = vmatprep.subr.mxu0 0.0
        %559 = vmatpush2.msra.mxu0 %v483
        %560 = vmatprep.subr.mxu0 0.0
        %561 = vmatpush2.msra.mxu0 %v482
        %562 = vmatprep.subr.mxu0 0.0
        %563 = vmatpush2.msra.mxu0 %v481
        %564 = vmatprep.mubr.f32.mxu0 %v498
        %565 = vmatmul.mubr.f32.gmra.mxu0 %v464
        %v566 = vpop.f32.mrf.mxu0
        %v567 = vadd.f32 0.0, %v566
        %v568 = vpop.f32.mrf.mxu0
        %569 = vdwg.mxu0
        %v570 = vmul.f32 %v456, %v456
        %v571 = vmul.f32 %v457, %v457
        %v572 = vmul.f32 %v458, %v458
        %v573 = vmul.f32 %v459, %v459
        %v574 = vmul.f32 %v460, %v460
        %v575 = vmul.f32 %v461, %v461
        %v576 = vmul.f32 %v462, %v462
        %v577 = vmul.f32 %v463, %v463
        %vm578 = vcmask 130048
        %v579 = vsel %vm578, %v570, 0.0
        %580 = vadd.xlane.f32.xlu0 %v579
        %v581 = vpop.xlane.xlu0 %580
        %v582 = vsel %vm578, %v571, 0.0
        %583 = vadd.xlane.f32.xlu0 %v582
        %v584 = vpop.xlane.xlu0 %583
        %v585 = vsel %vm578, %v572, 0.0
        %586 = vadd.xlane.f32.xlu0 %v585
        %v587 = vpop.xlane.xlu0 %586
        %v588 = vsel %vm578, %v573, 0.0
        %589 = vadd.xlane.f32.xlu0 %v588
        %v590 = vpop.xlane.xlu0 %589
        %v591 = vsel %vm578, %v574, 0.0
        %592 = vadd.xlane.f32.xlu0 %v591
        %v593 = vpop.xlane.xlu0 %592
        %v594 = vsel %vm578, %v575, 0.0
        %595 = vadd.xlane.f32.xlu0 %v594
        %v596 = vpop.xlane.xlu0 %595
        %v597 = vsel %vm578, %v576, 0.0
        %598 = vadd.xlane.f32.xlu0 %v597
        %v599 = vpop.xlane.xlu0 %598
        %v600 = vsel %vm578, %v577, 0.0
        %601 = vadd.xlane.f32.xlu0 %v600
        %v602 = vpop.xlane.xlu0 %601
        %v603 = vadd.f32 %v581, 1e-12
        %v604 = vadd.f32 %v584, 1e-12
        %v605 = vadd.f32 %v587, 1e-12
        %v606 = vadd.f32 %v590, 1e-12
        %v607 = vadd.f32 %v593, 1e-12
        %v608 = vadd.f32 %v596, 1e-12
        %v609 = vadd.f32 %v599, 1e-12
        %v610 = vadd.f32 %v602, 1e-12
        %v611 = vrsqrt.pop %v603
        %v612 = vrsqrt.pop %v604
        %v613 = vrsqrt.pop %v605
        %v614 = vrsqrt.pop %v606
        %v615 = vrsqrt.pop %v607
        %v616 = vrsqrt.pop %v608
        %v617 = vrsqrt.pop %v609
        %v618 = vrsqrt.pop %v610
        %v619 = vmul.f32 %v456, %v611
        %v620 = vmul.f32 %v457, %v612
        %v621 = vmul.f32 %v458, %v613
        %v622 = vmul.f32 %v459, %v614
        %v623 = vmul.f32 %v460, %v615
        %v624 = vmul.f32 %v461, %v616
        %v625 = vmul.f32 %v462, %v617
        %v626 = vmul.f32 %v463, %v618
        %v627 = vmul.f32 %v432, %v432
        %v628 = vmul.f32 %v433, %v433
        %v629 = vmul.f32 %v434, %v434
        %v630 = vmul.f32 %v435, %v435
        %v631 = vmul.f32 %v436, %v436
        %v632 = vmul.f32 %v437, %v437
        %v633 = vmul.f32 %v438, %v438
        %v634 = vmul.f32 %v439, %v439
        %v635 = vmul.f32 %v440, %v440
        %v636 = vmul.f32 %v441, %v441
        %v637 = vmul.f32 %v442, %v442
        %v638 = vmul.f32 %v443, %v443
        %v639 = vmul.f32 %v444, %v444
        %v640 = vmul.f32 %v445, %v445
        %v641 = vmul.f32 %v446, %v446
        %v642 = vmul.f32 %v447, %v447
        %v643 = vmul.f32 %v448, %v448
        %v644 = vmul.f32 %v449, %v449
        %v645 = vmul.f32 %v450, %v450
        %v646 = vmul.f32 %v451, %v451
        %v647 = vmul.f32 %v452, %v452
        %v648 = vmul.f32 %v453, %v453
        %v649 = vmul.f32 %v454, %v454
        %v650 = vmul.f32 %v455, %v455
        %v651 = vsel %vm578, %v627, 0.0
        %652 = vadd.xlane.f32.xlu0 %v651
        %v653 = vpop.xlane.xlu0 %652
        %v654 = vsel %vm578, %v628, 0.0
        %655 = vadd.xlane.f32.xlu0 %v654
        %v656 = vpop.xlane.xlu0 %655
        %v657 = vsel %vm578, %v629, 0.0
        %658 = vadd.xlane.f32.xlu0 %v657
        %v659 = vpop.xlane.xlu0 %658
        %v660 = vsel %vm578, %v630, 0.0
        %661 = vadd.xlane.f32.xlu0 %v660
        %v662 = vpop.xlane.xlu0 %661
        %v663 = vsel %vm578, %v631, 0.0
        %664 = vadd.xlane.f32.xlu0 %v663
        %v665 = vpop.xlane.xlu0 %664
        %v666 = vsel %vm578, %v632, 0.0
        %667 = vadd.xlane.f32.xlu0 %v666
        %v668 = vpop.xlane.xlu0 %667
        %v669 = vsel %vm578, %v633, 0.0
        %670 = vadd.xlane.f32.xlu0 %v669
        %v671 = vpop.xlane.xlu0 %670
        %v672 = vsel %vm578, %v634, 0.0
        %673 = vadd.xlane.f32.xlu0 %v672
        %v674 = vpop.xlane.xlu0 %673
        %v675 = vsel %vm578, %v635, 0.0
        %676 = vadd.xlane.f32.xlu0 %v675
        %v677 = vpop.xlane.xlu0 %676
        %v678 = vsel %vm578, %v636, 0.0
        %679 = vadd.xlane.f32.xlu0 %v678
        %v680 = vpop.xlane.xlu0 %679
        %v681 = vsel %vm578, %v637, 0.0
        %682 = vadd.xlane.f32.xlu0 %v681
        %v683 = vpop.xlane.xlu0 %682
        %v684 = vsel %vm578, %v638, 0.0
        %685 = vadd.xlane.f32.xlu0 %v684
        %v686 = vpop.xlane.xlu0 %685
        %v687 = vsel %vm578, %v639, 0.0
        %688 = vadd.xlane.f32.xlu0 %v687
        %v689 = vpop.xlane.xlu0 %688
        %v690 = vsel %vm578, %v640, 0.0
        %691 = vadd.xlane.f32.xlu0 %v690
        %v692 = vpop.xlane.xlu0 %691
        %v693 = vsel %vm578, %v641, 0.0
        %694 = vadd.xlane.f32.xlu0 %v693
        %v695 = vpop.xlane.xlu0 %694
        %v696 = vsel %vm578, %v642, 0.0
        %697 = vadd.xlane.f32.xlu0 %v696
        %v698 = vpop.xlane.xlu0 %697
        %v699 = vsel %vm578, %v643, 0.0
        %700 = vadd.xlane.f32.xlu0 %v699
        %v701 = vpop.xlane.xlu0 %700
        %v702 = vsel %vm578, %v644, 0.0
        %703 = vadd.xlane.f32.xlu0 %v702
        %v704 = vpop.xlane.xlu0 %703
        %v705 = vsel %vm578, %v645, 0.0
        %706 = vadd.xlane.f32.xlu0 %v705
        %v707 = vpop.xlane.xlu0 %706
        %v708 = vsel %vm578, %v646, 0.0
        %709 = vadd.xlane.f32.xlu0 %v708
        %v710 = vpop.xlane.xlu0 %709
        %v711 = vsel %vm578, %v647, 0.0
        %712 = vadd.xlane.f32.xlu0 %v711
        %v713 = vpop.xlane.xlu0 %712
        %v714 = vsel %vm578, %v648, 0.0
        %715 = vadd.xlane.f32.xlu0 %v714
        %v716 = vpop.xlane.xlu0 %715
        %v717 = vsel %vm578, %v649, 0.0
        %718 = vadd.xlane.f32.xlu0 %v717
        %v719 = vpop.xlane.xlu0 %718
        %v720 = vsel %vm578, %v650, 0.0
        %721 = vadd.xlane.f32.xlu0 %v720
        %v722 = vpop.xlane.xlu0 %721
        %v723 = vadd.f32 %v653, 1e-12
        %v724 = vadd.f32 %v656, 1e-12
        %v725 = vadd.f32 %v659, 1e-12
        %v726 = vadd.f32 %v662, 1e-12
        %v727 = vadd.f32 %v665, 1e-12
        %v728 = vadd.f32 %v668, 1e-12
        %v729 = vadd.f32 %v671, 1e-12
        %v730 = vadd.f32 %v674, 1e-12
        %v731 = vadd.f32 %v677, 1e-12
        %v732 = vadd.f32 %v680, 1e-12
        %v733 = vadd.f32 %v683, 1e-12
        %v734 = vadd.f32 %v686, 1e-12
        %v735 = vadd.f32 %v689, 1e-12
        %v736 = vadd.f32 %v692, 1e-12
        %v737 = vadd.f32 %v695, 1e-12
        %v738 = vadd.f32 %v698, 1e-12
        %v739 = vadd.f32 %v701, 1e-12
        %v740 = vadd.f32 %v704, 1e-12
        %v741 = vadd.f32 %v707, 1e-12
        %v742 = vadd.f32 %v710, 1e-12
        %v743 = vadd.f32 %v713, 1e-12
        %v744 = vadd.f32 %v716, 1e-12
        %v745 = vadd.f32 %v719, 1e-12
        %v746 = vadd.f32 %v722, 1e-12
        %v747 = vrsqrt.pop %v723
        %v748 = vrsqrt.pop %v724
        %v749 = vrsqrt.pop %v725
        %v750 = vrsqrt.pop %v726
        %v751 = vrsqrt.pop %v727
        %v752 = vrsqrt.pop %v728
        %v753 = vrsqrt.pop %v729
        %v754 = vrsqrt.pop %v730
        %v755 = vrsqrt.pop %v731
        %v756 = vrsqrt.pop %v732
        %v757 = vrsqrt.pop %v733
        %v758 = vrsqrt.pop %v734
        %v759 = vrsqrt.pop %v735
        %v760 = vrsqrt.pop %v736
        %v761 = vrsqrt.pop %v737
        %v762 = vrsqrt.pop %v738
        %v763 = vrsqrt.pop %v739
        %v764 = vrsqrt.pop %v740
        %v765 = vrsqrt.pop %v741
        %v766 = vrsqrt.pop %v742
        %v767 = vrsqrt.pop %v743
        %v768 = vrsqrt.pop %v744
        %v769 = vrsqrt.pop %v745
        %v770 = vrsqrt.pop %v746
        %v771 = vmul.f32 %v432, %v747
        %v772 = vmul.f32 %v433, %v748
        %v773 = vmul.f32 %v434, %v749
        %v774 = vmul.f32 %v435, %v750
        %v775 = vmul.f32 %v436, %v751
        %v776 = vmul.f32 %v437, %v752
        %v777 = vmul.f32 %v438, %v753
        %v778 = vmul.f32 %v439, %v754
        %v779 = vmul.f32 %v440, %v755
        %v780 = vmul.f32 %v441, %v756
        %v781 = vmul.f32 %v442, %v757
        %v782 = vmul.f32 %v443, %v758
        %v783 = vmul.f32 %v444, %v759
        %v784 = vmul.f32 %v445, %v760
        %v785 = vmul.f32 %v446, %v761
        %v786 = vmul.f32 %v447, %v762
        %v787 = vmul.f32 %v448, %v763
        %v788 = vmul.f32 %v449, %v764
        %v789 = vmul.f32 %v450, %v765
        %v790 = vmul.f32 %v451, %v766
        %v791 = vmul.f32 %v452, %v767
        %v792 = vmul.f32 %v453, %v768
        %v793 = vmul.f32 %v454, %v769
        %v794 = vmul.f32 %v455, %v770
        %v795 = vpack.c.bf16 %v620, %v619
        %v796 = vpack.c.bf16 %v622, %v621
        %v797 = vpack.c.bf16 %v624, %v623
        %v798 = vpack.c.bf16 %v626, %v625
        %v799 = vpack.c.bf16 %v772, %v771
        %v800 = vpack.c.bf16 %v774, %v773
        %v801 = vpack.c.bf16 %v776, %v775
        %v802 = vpack.c.bf16 %v778, %v777
        %v803 = vpack.c.bf16 %v780, %v779
        %v804 = vpack.c.bf16 %v782, %v781
        %v805 = vpack.c.bf16 %v784, %v783
        %v806 = vpack.c.bf16 %v786, %v785
        %v807 = vpack.c.bf16 %v788, %v787
        %v808 = vpack.c.bf16 %v790, %v789
        %v809 = vpack.c.bf16 %v792, %v791
        %v810 = vpack.c.bf16 %v794, %v793
        %v812 = vsel %vm578, %v795, 0
        %v815 = vsel %vm578, %v796, 0
        %v818 = vsel %vm578, %v797, 0
        %v821 = vsel %vm578, %v798, 0
        %v824 = vsel %vm578, %v799, 0
        %v827 = vsel %vm578, %v800, 0
        %v830 = vsel %vm578, %v801, 0
        %v833 = vsel %vm578, %v802, 0
        %835 = vmatprep.subr.bf16.mxu0 0
        %836 = vmatpush1.bf16.xpose.msra.mxu0 0
        %837 = vmatprep.subr.bf16.mxu0 0
        %838 = vmatpush1.bf16.xpose.msra.mxu0 0
        %839 = vmatprep.subr.bf16.mxu0 0
        %840 = vmatpush1.bf16.xpose.msra.mxu0 0
        %841 = vmatprep.subr.bf16.mxu0 0
        %842 = vmatpush1.bf16.xpose.msra.mxu0 0
        %843 = vmatprep.subr.bf16.mxu0 0
        %844 = vmatpush1.bf16.xpose.msra.mxu0 %v833
        %845 = vmatprep.subr.bf16.mxu0 0
        %846 = vmatpush1.bf16.xpose.msra.mxu0 %v830
        %847 = vmatprep.subr.bf16.mxu0 0
        %848 = vmatpush1.bf16.xpose.msra.mxu0 %v827
        %849 = vmatprep.subr.bf16.mxu0 0
        %850 = vmatpush1.bf16.xpose.msra.mxu0 %v824
        %851 = vmatprep.subr.bf16.mxu0 0
        %852 = vmatpush2.bf16.xpose.msra.mxu0 0
        %853 = vmatprep.subr.bf16.mxu0 0
        %854 = vmatpush2.bf16.xpose.msra.mxu0 0
        %855 = vmatprep.subr.bf16.mxu0 0
        %856 = vmatpush2.bf16.xpose.msra.mxu0 0
        %857 = vmatprep.subr.bf16.mxu0 0
        %858 = vmatpush2.bf16.xpose.msra.mxu0 0
        %859 = vmatprep.subr.bf16.mxu0 0
        %860 = vmatpush2.bf16.xpose.msra.mxu0 0
        %861 = vmatprep.subr.bf16.mxu0 0
        %862 = vmatpush2.bf16.xpose.msra.mxu0 0
        %863 = vmatprep.subr.bf16.mxu0 0
        %864 = vmatpush2.bf16.xpose.msra.mxu0 0
        %865 = vmatprep.subr.bf16.mxu0 0
        %866 = vmatpush2.bf16.xpose.msra.mxu0 0
        %867 = vmatprep.mubr.bf16.mxu0 0
        %868 = vmatmul.mubr.bf16.gmra.mxu0 %v812
        %v869 = vpop.f32.mrf.mxu0
        %v870 = vadd.f32 0.0, %v869
        %v871 = vpop.f32.mrf.mxu0
        %v872 = vpop.f32.mrf.mxu0
        %v873 = vadd.f32 0.0, %v872
        %v874 = vpop.f32.mrf.mxu0
        %875 = vmatprep.mubr.bf16.mxu0 0
        %876 = vmatmul.mubr.bf16.gmra.mxu0 %v815
        %v877 = vpop.f32.mrf.mxu0
        %v878 = vadd.f32 0.0, %v877
        %v879 = vpop.f32.mrf.mxu0
        %v880 = vpop.f32.mrf.mxu0
        %v881 = vadd.f32 0.0, %v880
        %v882 = vpop.f32.mrf.mxu0
        %883 = vmatprep.mubr.bf16.mxu0 0
        %884 = vmatmul.mubr.bf16.gmra.mxu0 %v818
        %v885 = vpop.f32.mrf.mxu0
        %v886 = vadd.f32 0.0, %v885
        %v887 = vpop.f32.mrf.mxu0
        %v888 = vpop.f32.mrf.mxu0
        %v889 = vadd.f32 0.0, %v888
        %v890 = vpop.f32.mrf.mxu0
        %891 = vmatprep.mubr.bf16.mxu0 0
        %892 = vmatmul.mubr.bf16.gmra.mxu0 %v821
        %v893 = vpop.f32.mrf.mxu0
        %v894 = vadd.f32 0.0, %v893
        %v895 = vpop.f32.mrf.mxu0
        %v896 = vpop.f32.mrf.mxu0
        %v897 = vadd.f32 0.0, %v896
        %v898 = vpop.f32.mrf.mxu0
        %899 = vdwg.mxu0
        %v901 = vsel %vm578, %v803, 0
        %v904 = vsel %vm578, %v804, 0
        %v907 = vsel %vm578, %v805, 0
        %v910 = vsel %vm578, %v806, 0
        %912 = vmatprep.subr.bf16.mxu0 0
        %913 = vmatpush1.bf16.xpose.msra.mxu0 0
        %914 = vmatprep.subr.bf16.mxu0 0
        %915 = vmatpush1.bf16.xpose.msra.mxu0 0
        %916 = vmatprep.subr.bf16.mxu0 0
        %917 = vmatpush1.bf16.xpose.msra.mxu0 0
        %918 = vmatprep.subr.bf16.mxu0 0
        %919 = vmatpush1.bf16.xpose.msra.mxu0 0
        %920 = vmatprep.subr.bf16.mxu0 0
        %921 = vmatpush1.bf16.xpose.msra.mxu0 %v910
        %922 = vmatprep.subr.bf16.mxu0 0
        %923 = vmatpush1.bf16.xpose.msra.mxu0 %v907
        %924 = vmatprep.subr.bf16.mxu0 0
        %925 = vmatpush1.bf16.xpose.msra.mxu0 %v904
        %926 = vmatprep.subr.bf16.mxu0 0
        %927 = vmatpush1.bf16.xpose.msra.mxu0 %v901
        %928 = vmatprep.subr.bf16.mxu0 0
        %929 = vmatpush2.bf16.xpose.msra.mxu0 0
        %930 = vmatprep.subr.bf16.mxu0 0
        %931 = vmatpush2.bf16.xpose.msra.mxu0 0
        %932 = vmatprep.subr.bf16.mxu0 0
        %933 = vmatpush2.bf16.xpose.msra.mxu0 0
        %934 = vmatprep.subr.bf16.mxu0 0
        %935 = vmatpush2.bf16.xpose.msra.mxu0 0
        %936 = vmatprep.subr.bf16.mxu0 0
        %937 = vmatpush2.bf16.xpose.msra.mxu0 0
        %938 = vmatprep.subr.bf16.mxu0 0
        %939 = vmatpush2.bf16.xpose.msra.mxu0 0
        %940 = vmatprep.subr.bf16.mxu0 0
        %941 = vmatpush2.bf16.xpose.msra.mxu0 0
        %942 = vmatprep.subr.bf16.mxu0 0
        %943 = vmatpush2.bf16.xpose.msra.mxu0 0
        %944 = vmatprep.mubr.bf16.mxu0 0
        %945 = vmatmul.mubr.bf16.gmra.mxu0 %v812
        %v946 = vpop.f32.mrf.mxu0
        %v947 = vadd.f32 0.0, %v946
        %v948 = vpop.f32.mrf.mxu0
        %v949 = vpop.f32.mrf.mxu0
        %v950 = vadd.f32 0.0, %v949
        %v951 = vpop.f32.mrf.mxu0
        %952 = vmatprep.mubr.bf16.mxu0 0
        %953 = vmatmul.mubr.bf16.gmra.mxu0 %v815
        %v954 = vpop.f32.mrf.mxu0
        %v955 = vadd.f32 0.0, %v954
        %v956 = vpop.f32.mrf.mxu0
        %v957 = vpop.f32.mrf.mxu0
        %v958 = vadd.f32 0.0, %v957
        %v959 = vpop.f32.mrf.mxu0
        %960 = vmatprep.mubr.bf16.mxu0 0
        %961 = vmatmul.mubr.bf16.gmra.mxu0 %v818
        %v962 = vpop.f32.mrf.mxu0
        %v963 = vadd.f32 0.0, %v962
        %v964 = vpop.f32.mrf.mxu0
        %v965 = vpop.f32.mrf.mxu0
        %v966 = vadd.f32 0.0, %v965
        %v967 = vpop.f32.mrf.mxu0
        %968 = vmatprep.mubr.bf16.mxu0 0
        %969 = vmatmul.mubr.bf16.gmra.mxu0 %v821
        %v970 = vpop.f32.mrf.mxu0
        %v971 = vadd.f32 0.0, %v970
        %v972 = vpop.f32.mrf.mxu0
        %v973 = vpop.f32.mrf.mxu0
        %v974 = vadd.f32 0.0, %v973
        %v975 = vpop.f32.mrf.mxu0
        %976 = vdwg.mxu0
        %v978 = vsel %vm578, %v807, 0
        %v981 = vsel %vm578, %v808, 0
        %v984 = vsel %vm578, %v809, 0
        %v987 = vsel %vm578, %v810, 0
        %989 = vmatprep.subr.bf16.mxu0 0
        %990 = vmatpush1.bf16.xpose.msra.mxu0 0
        %991 = vmatprep.subr.bf16.mxu0 0
        %992 = vmatpush1.bf16.xpose.msra.mxu0 0
        %993 = vmatprep.subr.bf16.mxu0 0
        %994 = vmatpush1.bf16.xpose.msra.mxu0 0
        %995 = vmatprep.subr.bf16.mxu0 0
        %996 = vmatpush1.bf16.xpose.msra.mxu0 0
        %997 = vmatprep.subr.bf16.mxu0 0
        %998 = vmatpush1.bf16.xpose.msra.mxu0 %v987
        %999 = vmatprep.subr.bf16.mxu0 0
        %1000 = vmatpush1.bf16.xpose.msra.mxu0 %v984
        %1001 = vmatprep.subr.bf16.mxu0 0
        %1002 = vmatpush1.bf16.xpose.msra.mxu0 %v981
        %1003 = vmatprep.subr.bf16.mxu0 0
        %1004 = vmatpush1.bf16.xpose.msra.mxu0 %v978
        %1005 = vmatprep.subr.bf16.mxu0 0
        %1006 = vmatpush2.bf16.xpose.msra.mxu0 0
        %1007 = vmatprep.subr.bf16.mxu0 0
        %1008 = vmatpush2.bf16.xpose.msra.mxu0 0
        %1009 = vmatprep.subr.bf16.mxu0 0
        %1010 = vmatpush2.bf16.xpose.msra.mxu0 0
        %1011 = vmatprep.subr.bf16.mxu0 0
        %1012 = vmatpush2.bf16.xpose.msra.mxu0 0
        %1013 = vmatprep.subr.bf16.mxu0 0
        %1014 = vmatpush2.bf16.xpose.msra.mxu0 0
        %1015 = vmatprep.subr.bf16.mxu0 0
        %1016 = vmatpush2.bf16.xpose.msra.mxu0 0
        %1017 = vmatprep.subr.bf16.mxu0 0
        %1018 = vmatpush2.bf16.xpose.msra.mxu0 0
        %1019 = vmatprep.subr.bf16.mxu0 0
        %1020 = vmatpush2.bf16.xpose.msra.mxu0 0
        %1021 = vmatprep.mubr.bf16.mxu0 0
        %1022 = vmatmul.mubr.bf16.gmra.mxu0 %v812
        %v1023 = vpop.f32.mrf.mxu0
        %v1024 = vadd.f32 0.0, %v1023
        %v1025 = vpop.f32.mrf.mxu0
        %v1026 = vpop.f32.mrf.mxu0
        %v1027 = vadd.f32 0.0, %v1026
        %v1028 = vpop.f32.mrf.mxu0
        %1029 = vmatprep.mubr.bf16.mxu0 0
        %1030 = vmatmul.mubr.bf16.gmra.mxu0 %v815
        %v1031 = vpop.f32.mrf.mxu0
        %v1032 = vadd.f32 0.0, %v1031
        %v1033 = vpop.f32.mrf.mxu0
        %v1034 = vpop.f32.mrf.mxu0
        %v1035 = vadd.f32 0.0, %v1034
        %v1036 = vpop.f32.mrf.mxu0
        %1037 = vmatprep.mubr.bf16.mxu0 0
        %1038 = vmatmul.mubr.bf16.gmra.mxu0 %v818
        %v1039 = vpop.f32.mrf.mxu0
        %v1040 = vadd.f32 0.0, %v1039
        %v1041 = vpop.f32.mrf.mxu0
        %v1042 = vpop.f32.mrf.mxu0
        %v1043 = vadd.f32 0.0, %v1042
        %v1044 = vpop.f32.mrf.mxu0
        %1045 = vmatprep.mubr.bf16.mxu0 0
        %1046 = vmatmul.mubr.bf16.gmra.mxu0 %v821
        %v1047 = vpop.f32.mrf.mxu0
        %v1048 = vadd.f32 0.0, %v1047
        %v1049 = vpop.f32.mrf.mxu0
        %v1050 = vpop.f32.mrf.mxu0
        %v1051 = vadd.f32 0.0, %v1050
        %v1052 = vpop.f32.mrf.mxu0
        %1053 = vdwg.mxu0
        %v1054 = vstv %s430
        %v1055 = vmul.f32 %v1054, %v870
        %v1056 = vmul.f32 %v1054, %v873
        %v1057 = vmul.f32 %v1054, %v878
        %v1058 = vmul.f32 %v1054, %v881
        %v1059 = vmul.f32 %v1054, %v886
        %v1060 = vmul.f32 %v1054, %v889
        %v1061 = vmul.f32 %v1054, %v894
        %v1062 = vmul.f32 %v1054, %v897
        %v1063 = vmul.f32 %v1054, %v947
        %v1064 = vmul.f32 %v1054, %v950
        %v1065 = vmul.f32 %v1054, %v955
        %v1066 = vmul.f32 %v1054, %v958
        %v1067 = vmul.f32 %v1054, %v963
        %v1068 = vmul.f32 %v1054, %v966
        %v1069 = vmul.f32 %v1054, %v971
        %v1070 = vmul.f32 %v1054, %v974
        %v1071 = vmul.f32 %v1054, %v1024
        %v1072 = vmul.f32 %v1054, %v1027
        %v1073 = vmul.f32 %v1054, %v1032
        %v1074 = vmul.f32 %v1054, %v1035
        %v1075 = vmul.f32 %v1054, %v1040
        %v1076 = vmul.f32 %v1054, %v1043
        %v1077 = vmul.f32 %v1054, %v1048
        %v1078 = vmul.f32 %v1054, %v1051
        %vm1079 = vcmask 523264
        %v1080 = vsel %vm1079, %v1055, -inf
        %1081 = vmax.xlane.f32.xlu0 %v1080
        %v1082 = vpop.xlane.xlu0 %1081
        %v1083 = vsel %vm1079, %v1056, -inf
        %1084 = vmax.xlane.f32.xlu0 %v1083
        %v1085 = vpop.xlane.xlu0 %1084
        %v1086 = vsel %vm1079, %v1057, -inf
        %1087 = vmax.xlane.f32.xlu0 %v1086
        %v1088 = vpop.xlane.xlu0 %1087
        %v1089 = vsel %vm1079, %v1058, -inf
        %1090 = vmax.xlane.f32.xlu0 %v1089
        %v1091 = vpop.xlane.xlu0 %1090
        %v1092 = vsel %vm1079, %v1059, -inf
        %1093 = vmax.xlane.f32.xlu0 %v1092
        %v1094 = vpop.xlane.xlu0 %1093
        %v1095 = vsel %vm1079, %v1060, -inf
        %1096 = vmax.xlane.f32.xlu0 %v1095
        %v1097 = vpop.xlane.xlu0 %1096
        %v1098 = vsel %vm1079, %v1061, -inf
        %1099 = vmax.xlane.f32.xlu0 %v1098
        %v1100 = vpop.xlane.xlu0 %1099
        %v1101 = vsel %vm1079, %v1062, -inf
        %1102 = vmax.xlane.f32.xlu0 %v1101
        %v1103 = vpop.xlane.xlu0 %1102
        %v1104 = vsel %vm1079, %v1063, -inf
        %1105 = vmax.xlane.f32.xlu0 %v1104
        %v1106 = vpop.xlane.xlu0 %1105
        %v1107 = vsel %vm1079, %v1064, -inf
        %1108 = vmax.xlane.f32.xlu0 %v1107
        %v1109 = vpop.xlane.xlu0 %1108
        %v1110 = vsel %vm1079, %v1065, -inf
        %1111 = vmax.xlane.f32.xlu0 %v1110
        %v1112 = vpop.xlane.xlu0 %1111
        %v1113 = vsel %vm1079, %v1066, -inf
        %1114 = vmax.xlane.f32.xlu0 %v1113
        %v1115 = vpop.xlane.xlu0 %1114
        %v1116 = vsel %vm1079, %v1067, -inf
        %1117 = vmax.xlane.f32.xlu0 %v1116
        %v1118 = vpop.xlane.xlu0 %1117
        %v1119 = vsel %vm1079, %v1068, -inf
        %1120 = vmax.xlane.f32.xlu0 %v1119
        %v1121 = vpop.xlane.xlu0 %1120
        %v1122 = vsel %vm1079, %v1069, -inf
        %1123 = vmax.xlane.f32.xlu0 %v1122
        %v1124 = vpop.xlane.xlu0 %1123
        %v1125 = vsel %vm1079, %v1070, -inf
        %1126 = vmax.xlane.f32.xlu0 %v1125
        %v1127 = vpop.xlane.xlu0 %1126
        %v1128 = vsel %vm1079, %v1071, -inf
        %1129 = vmax.xlane.f32.xlu0 %v1128
        %v1130 = vpop.xlane.xlu0 %1129
        %v1131 = vsel %vm1079, %v1072, -inf
        %1132 = vmax.xlane.f32.xlu0 %v1131
        %v1133 = vpop.xlane.xlu0 %1132
        %v1134 = vsel %vm1079, %v1073, -inf
        %1135 = vmax.xlane.f32.xlu0 %v1134
        %v1136 = vpop.xlane.xlu0 %1135
        %v1137 = vsel %vm1079, %v1074, -inf
        %1138 = vmax.xlane.f32.xlu0 %v1137
        %v1139 = vpop.xlane.xlu0 %1138
        %v1140 = vsel %vm1079, %v1075, -inf
        %1141 = vmax.xlane.f32.xlu0 %v1140
        %v1142 = vpop.xlane.xlu0 %1141
        %v1143 = vsel %vm1079, %v1076, -inf
        %1144 = vmax.xlane.f32.xlu0 %v1143
        %v1145 = vpop.xlane.xlu0 %1144
        %v1146 = vsel %vm1079, %v1077, -inf
        %1147 = vmax.xlane.f32.xlu0 %v1146
        %v1148 = vpop.xlane.xlu0 %1147
        %v1149 = vsel %vm1079, %v1078, -inf
        %1150 = vmax.xlane.f32.xlu0 %v1149
        %v1151 = vpop.xlane.xlu0 %1150
        %v1152 = vsub.f32 %v1055, %v1082
        %v1153 = vsub.f32 %v1056, %v1085
        %v1154 = vsub.f32 %v1057, %v1088
        %v1155 = vsub.f32 %v1058, %v1091
        %v1156 = vsub.f32 %v1059, %v1094
        %v1157 = vsub.f32 %v1060, %v1097
        %v1158 = vsub.f32 %v1061, %v1100
        %v1159 = vsub.f32 %v1062, %v1103
        %v1160 = vsub.f32 %v1063, %v1106
        %v1161 = vsub.f32 %v1064, %v1109
        %v1162 = vsub.f32 %v1065, %v1112
        %v1163 = vsub.f32 %v1066, %v1115
        %v1164 = vsub.f32 %v1067, %v1118
        %v1165 = vsub.f32 %v1068, %v1121
        %v1166 = vsub.f32 %v1069, %v1124
        %v1167 = vsub.f32 %v1070, %v1127
        %v1168 = vsub.f32 %v1071, %v1130
        %v1169 = vsub.f32 %v1072, %v1133
        %v1170 = vsub.f32 %v1073, %v1136
        %v1171 = vsub.f32 %v1074, %v1139
        %v1172 = vsub.f32 %v1075, %v1142
        %v1173 = vsub.f32 %v1076, %v1145
        %v1174 = vsub.f32 %v1077, %v1148
        %v1175 = vsub.f32 %v1078, %v1151
        %v1176 = vmul.f32 %v1152, 1.442695
        %v1177 = vpow.pop %v1176
        %v1178 = vmul.f32 %v1153, 1.442695
        %v1179 = vpow.pop %v1178
        %v1180 = vmul.f32 %v1154, 1.442695
        %v1181 = vpow.pop %v1180
        %v1182 = vmul.f32 %v1155, 1.442695
        %v1183 = vpow.pop %v1182
        %v1184 = vmul.f32 %v1156, 1.442695
        %v1185 = vpow.pop %v1184
        %v1186 = vmul.f32 %v1157, 1.442695
        %v1187 = vpow.pop %v1186
        %v1188 = vmul.f32 %v1158, 1.442695
        %v1189 = vpow.pop %v1188
        %v1190 = vmul.f32 %v1159, 1.442695
        %v1191 = vpow.pop %v1190
        %v1192 = vmul.f32 %v1160, 1.442695
        %v1193 = vpow.pop %v1192
        %v1194 = vmul.f32 %v1161, 1.442695
        %v1195 = vpow.pop %v1194
        %v1196 = vmul.f32 %v1162, 1.442695
        %v1197 = vpow.pop %v1196
        %v1198 = vmul.f32 %v1163, 1.442695
        %v1199 = vpow.pop %v1198
        %v1200 = vmul.f32 %v1164, 1.442695
        %v1201 = vpow.pop %v1200
        %v1202 = vmul.f32 %v1165, 1.442695
        %v1203 = vpow.pop %v1202
        %v1204 = vmul.f32 %v1166, 1.442695
        %v1205 = vpow.pop %v1204
        %v1206 = vmul.f32 %v1167, 1.442695
        %v1207 = vpow.pop %v1206
        %v1208 = vmul.f32 %v1168, 1.442695
        %v1209 = vpow.pop %v1208
        %v1210 = vmul.f32 %v1169, 1.442695
        %v1211 = vpow.pop %v1210
        %v1212 = vmul.f32 %v1170, 1.442695
        %v1213 = vpow.pop %v1212
        %v1214 = vmul.f32 %v1171, 1.442695
        %v1215 = vpow.pop %v1214
        %v1216 = vmul.f32 %v1172, 1.442695
        %v1217 = vpow.pop %v1216
        %v1218 = vmul.f32 %v1173, 1.442695
        %v1219 = vpow.pop %v1218
        %v1220 = vmul.f32 %v1174, 1.442695
        %v1221 = vpow.pop %v1220
        %v1222 = vmul.f32 %v1175, 1.442695
        %v1223 = vpow.pop %v1222
        %v1224 = vsel %vm1079, %v1177, 0.0
        %1225 = vadd.xlane.f32.xlu0 %v1224
        %v1226 = vpop.xlane.xlu0 %1225
        %v1227 = vsel %vm1079, %v1179, 0.0
        %1228 = vadd.xlane.f32.xlu0 %v1227
        %v1229 = vpop.xlane.xlu0 %1228
        %v1230 = vsel %vm1079, %v1181, 0.0
        %1231 = vadd.xlane.f32.xlu0 %v1230
        %v1232 = vpop.xlane.xlu0 %1231
        %v1233 = vsel %vm1079, %v1183, 0.0
        %1234 = vadd.xlane.f32.xlu0 %v1233
        %v1235 = vpop.xlane.xlu0 %1234
        %v1236 = vsel %vm1079, %v1185, 0.0
        %1237 = vadd.xlane.f32.xlu0 %v1236
        %v1238 = vpop.xlane.xlu0 %1237
        %v1239 = vsel %vm1079, %v1187, 0.0
        %1240 = vadd.xlane.f32.xlu0 %v1239
        %v1241 = vpop.xlane.xlu0 %1240
        %v1242 = vsel %vm1079, %v1189, 0.0
        %1243 = vadd.xlane.f32.xlu0 %v1242
        %v1244 = vpop.xlane.xlu0 %1243
        %v1245 = vsel %vm1079, %v1191, 0.0
        %1246 = vadd.xlane.f32.xlu0 %v1245
        %v1247 = vpop.xlane.xlu0 %1246
        %v1248 = vsel %vm1079, %v1193, 0.0
        %1249 = vadd.xlane.f32.xlu0 %v1248
        %v1250 = vpop.xlane.xlu0 %1249
        %v1251 = vsel %vm1079, %v1195, 0.0
        %1252 = vadd.xlane.f32.xlu0 %v1251
        %v1253 = vpop.xlane.xlu0 %1252
        %v1254 = vsel %vm1079, %v1197, 0.0
        %1255 = vadd.xlane.f32.xlu0 %v1254
        %v1256 = vpop.xlane.xlu0 %1255
        %v1257 = vsel %vm1079, %v1199, 0.0
        %1258 = vadd.xlane.f32.xlu0 %v1257
        %v1259 = vpop.xlane.xlu0 %1258
        %v1260 = vsel %vm1079, %v1201, 0.0
        %1261 = vadd.xlane.f32.xlu0 %v1260
        %v1262 = vpop.xlane.xlu0 %1261
        %v1263 = vsel %vm1079, %v1203, 0.0
        %1264 = vadd.xlane.f32.xlu0 %v1263
        %v1265 = vpop.xlane.xlu0 %1264
        %v1266 = vsel %vm1079, %v1205, 0.0
        %1267 = vadd.xlane.f32.xlu0 %v1266
        %v1268 = vpop.xlane.xlu0 %1267
        %v1269 = vsel %vm1079, %v1207, 0.0
        %1270 = vadd.xlane.f32.xlu0 %v1269
        %v1271 = vpop.xlane.xlu0 %1270
        %v1272 = vsel %vm1079, %v1209, 0.0
        %1273 = vadd.xlane.f32.xlu0 %v1272
        %v1274 = vpop.xlane.xlu0 %1273
        %v1275 = vsel %vm1079, %v1211, 0.0
        %1276 = vadd.xlane.f32.xlu0 %v1275
        %v1277 = vpop.xlane.xlu0 %1276
        %v1278 = vsel %vm1079, %v1213, 0.0
        %1279 = vadd.xlane.f32.xlu0 %v1278
        %v1280 = vpop.xlane.xlu0 %1279
        %v1281 = vsel %vm1079, %v1215, 0.0
        %1282 = vadd.xlane.f32.xlu0 %v1281
        %v1283 = vpop.xlane.xlu0 %1282
        %v1284 = vsel %vm1079, %v1217, 0.0
        %1285 = vadd.xlane.f32.xlu0 %v1284
        %v1286 = vpop.xlane.xlu0 %1285
        %v1287 = vsel %vm1079, %v1219, 0.0
        %1288 = vadd.xlane.f32.xlu0 %v1287
        %v1289 = vpop.xlane.xlu0 %1288
        %v1290 = vsel %vm1079, %v1221, 0.0
        %1291 = vadd.xlane.f32.xlu0 %v1290
        %v1292 = vpop.xlane.xlu0 %1291
        %v1293 = vsel %vm1079, %v1223, 0.0
        %1294 = vadd.xlane.f32.xlu0 %v1293
        %v1295 = vpop.xlane.xlu0 %1294
        %v1296 = vrcp.pop %v1226
        %v1297 = vrcp.pop %v1229
        %v1298 = vrcp.pop %v1232
        %v1299 = vrcp.pop %v1235
        %v1300 = vrcp.pop %v1238
        %v1301 = vrcp.pop %v1241
        %v1302 = vrcp.pop %v1244
        %v1303 = vrcp.pop %v1247
        %v1304 = vrcp.pop %v1250
        %v1305 = vrcp.pop %v1253
        %v1306 = vrcp.pop %v1256
        %v1307 = vrcp.pop %v1259
        %v1308 = vrcp.pop %v1262
        %v1309 = vrcp.pop %v1265
        %v1310 = vrcp.pop %v1268
        %v1311 = vrcp.pop %v1271
        %v1312 = vrcp.pop %v1274
        %v1313 = vrcp.pop %v1277
        %v1314 = vrcp.pop %v1280
        %v1315 = vrcp.pop %v1283
        %v1316 = vrcp.pop %v1286
        %v1317 = vrcp.pop %v1289
        %v1318 = vrcp.pop %v1292
        %v1319 = vrcp.pop %v1295
        %v1320 = vmul.f32 %v1177, %v1296
        %v1321 = vmul.f32 %v1179, %v1297
        %v1322 = vmul.f32 %v1181, %v1298
        %v1323 = vmul.f32 %v1183, %v1299
        %v1324 = vmul.f32 %v1185, %v1300
        %v1325 = vmul.f32 %v1187, %v1301
        %v1326 = vmul.f32 %v1189, %v1302
        %v1327 = vmul.f32 %v1191, %v1303
        %v1328 = vmul.f32 %v1193, %v1304
        %v1329 = vmul.f32 %v1195, %v1305
        %v1330 = vmul.f32 %v1197, %v1306
        %v1331 = vmul.f32 %v1199, %v1307
        %v1332 = vmul.f32 %v1201, %v1308
        %v1333 = vmul.f32 %v1203, %v1309
        %v1334 = vmul.f32 %v1205, %v1310
        %v1335 = vmul.f32 %v1207, %v1311
        %v1336 = vmul.f32 %v1209, %v1312
        %v1337 = vmul.f32 %v1211, %v1313
        %v1338 = vmul.f32 %v1213, %v1314
        %v1339 = vmul.f32 %v1215, %v1315
        %v1340 = vmul.f32 %v1217, %v1316
        %v1341 = vmul.f32 %v1219, %v1317
        %v1342 = vmul.f32 %v1221, %v1318
        %v1343 = vmul.f32 %v1223, %v1319
        %v1346 = vunpack.c.l.s4 1966171168
        %v1347 = vunpack.c.0.s8 %v1346
        %v1348 = vlaneseq
        %v1349 = vshrl.u32 %v1348, 7
        %v1350 = vsub.s32 %v1347, %v1349
        %v1351 = vrot.slane %v567, %v1350
        %v1352 = vcombine.high %v1351, %v1351
        %v1354 = vunpack.c.l.s4 1966171168
        %v1355 = vunpack.c.0.s8 %v1354
        %v1356 = vlaneseq
        %v1357 = vshrl.u32 %v1356, 7
        %v1358 = vsub.s32 %v1355, %v1357
        %v1359 = vrot.slane %v1351, %v1358
        %v1361 = vunpack.c.l.s4 1966171168
        %v1362 = vunpack.c.0.s8 %v1361
        %v1363 = vlaneseq
        %v1364 = vshrl.u32 %v1363, 7
        %v1365 = vsub.s32 %v1362, %v1364
        %v1366 = vrot.slane %v1352, %v1365
        %v1367 = vcombine.high %v1359, %v1359
        %v1368 = vlaneseq
        %v1369 = vshrl.u32 %v1368, 7
        %v1370 = vsub.s32 0, %v1369
        %v1371 = vrot.slane %v1359, %v1370
        %v1372 = vlaneseq
        %v1373 = vshrl.u32 %v1372, 7
        %v1374 = vsub.s32 0, %v1373
        %v1375 = vrot.slane %v1366, %v1374
        %v1376 = vlaneseq
        %v1377 = vshrl.u32 %v1376, 7
        %v1378 = vsub.s32 0, %v1377
        %v1379 = vrot.slane %v1367, %v1378
        %v1383 = vmul.f32 %v1320, %v1371
        %v1384 = vmul.f32 %v1321, %v1371
        %v1385 = vmul.f32 %v1322, %v1371
        %v1386 = vmul.f32 %v1323, %v1371
        %v1387 = vmul.f32 %v1324, %v1371
        %v1388 = vmul.f32 %v1325, %v1371
        %v1389 = vmul.f32 %v1326, %v1371
        %v1390 = vmul.f32 %v1327, %v1371
        %v1391 = vmul.f32 %v1328, %v1375
        %v1392 = vmul.f32 %v1329, %v1375
        %v1393 = vmul.f32 %v1330, %v1375
        %v1394 = vmul.f32 %v1331, %v1375
        %v1395 = vmul.f32 %v1332, %v1375
        %v1396 = vmul.f32 %v1333, %v1375
        %v1397 = vmul.f32 %v1334, %v1375
        %v1398 = vmul.f32 %v1335, %v1375
        %v1399 = vmul.f32 %v1336, %v1379
        %v1400 = vmul.f32 %v1337, %v1379
        %v1401 = vmul.f32 %v1338, %v1379
        %v1402 = vmul.f32 %v1339, %v1379
        %v1403 = vmul.f32 %v1340, %v1379
        %v1404 = vmul.f32 %v1341, %v1379
        %v1405 = vmul.f32 %v1342, %v1379
        %v1406 = vmul.f32 %v1343, %v1379
        %v1407 = vsel %vm1079, %v1383, 0.0
        %1408 = vadd.xlane.f32.xlu0 %v1407
        %v1409 = vpop.xlane.xlu0 %1408
        %v1410 = vsel %vm1079, %v1384, 0.0
        %1411 = vadd.xlane.f32.xlu0 %v1410
        %v1412 = vpop.xlane.xlu0 %1411
        %v1413 = vsel %vm1079, %v1385, 0.0
        %1414 = vadd.xlane.f32.xlu0 %v1413
        %v1415 = vpop.xlane.xlu0 %1414
        %v1416 = vsel %vm1079, %v1386, 0.0
        %1417 = vadd.xlane.f32.xlu0 %v1416
        %v1418 = vpop.xlane.xlu0 %1417
        %v1419 = vsel %vm1079, %v1387, 0.0
        %1420 = vadd.xlane.f32.xlu0 %v1419
        %v1421 = vpop.xlane.xlu0 %1420
        %v1422 = vsel %vm1079, %v1388, 0.0
        %1423 = vadd.xlane.f32.xlu0 %v1422
        %v1424 = vpop.xlane.xlu0 %1423
        %v1425 = vsel %vm1079, %v1389, 0.0
        %1426 = vadd.xlane.f32.xlu0 %v1425
        %v1427 = vpop.xlane.xlu0 %1426
        %v1428 = vsel %vm1079, %v1390, 0.0
        %1429 = vadd.xlane.f32.xlu0 %v1428
        %v1430 = vpop.xlane.xlu0 %1429
        %v1431 = vsel %vm1079, %v1391, 0.0
        %1432 = vadd.xlane.f32.xlu0 %v1431
        %v1433 = vpop.xlane.xlu0 %1432
        %v1434 = vsel %vm1079, %v1392, 0.0
        %1435 = vadd.xlane.f32.xlu0 %v1434
        %v1436 = vpop.xlane.xlu0 %1435
        %v1437 = vsel %vm1079, %v1393, 0.0
        %1438 = vadd.xlane.f32.xlu0 %v1437
        %v1439 = vpop.xlane.xlu0 %1438
        %v1440 = vsel %vm1079, %v1394, 0.0
        %1441 = vadd.xlane.f32.xlu0 %v1440
        %v1442 = vpop.xlane.xlu0 %1441
        %v1443 = vsel %vm1079, %v1395, 0.0
        %1444 = vadd.xlane.f32.xlu0 %v1443
        %v1445 = vpop.xlane.xlu0 %1444
        %v1446 = vsel %vm1079, %v1396, 0.0
        %1447 = vadd.xlane.f32.xlu0 %v1446
        %v1448 = vpop.xlane.xlu0 %1447
        %v1449 = vsel %vm1079, %v1397, 0.0
        %1450 = vadd.xlane.f32.xlu0 %v1449
        %v1451 = vpop.xlane.xlu0 %1450
        %v1452 = vsel %vm1079, %v1398, 0.0
        %1453 = vadd.xlane.f32.xlu0 %v1452
        %v1454 = vpop.xlane.xlu0 %1453
        %v1455 = vsel %vm1079, %v1399, 0.0
        %1456 = vadd.xlane.f32.xlu0 %v1455
        %v1457 = vpop.xlane.xlu0 %1456
        %v1458 = vsel %vm1079, %v1400, 0.0
        %1459 = vadd.xlane.f32.xlu0 %v1458
        %v1460 = vpop.xlane.xlu0 %1459
        %v1461 = vsel %vm1079, %v1401, 0.0
        %1462 = vadd.xlane.f32.xlu0 %v1461
        %v1463 = vpop.xlane.xlu0 %1462
        %v1464 = vsel %vm1079, %v1402, 0.0
        %1465 = vadd.xlane.f32.xlu0 %v1464
        %v1466 = vpop.xlane.xlu0 %1465
        %v1467 = vsel %vm1079, %v1403, 0.0
        %1468 = vadd.xlane.f32.xlu0 %v1467
        %v1469 = vpop.xlane.xlu0 %1468
        %v1470 = vsel %vm1079, %v1404, 0.0
        %1471 = vadd.xlane.f32.xlu0 %v1470
        %v1472 = vpop.xlane.xlu0 %1471
        %v1473 = vsel %vm1079, %v1405, 0.0
        %1474 = vadd.xlane.f32.xlu0 %v1473
        %v1475 = vpop.xlane.xlu0 %1474
        %v1476 = vsel %vm1079, %v1406, 0.0
        %1477 = vadd.xlane.f32.xlu0 %v1476
        %v1478 = vpop.xlane.xlu0 %1477
        %v1479 = vld [vmem:[%s6] sm:$0xff]
        %v1480 = vld [vmem:[%s6 + $0x8] sm:$0xff]
        %v1481 = vld [vmem:[%s6 + $0x10] sm:$0xff]
        %v1482 = vld [vmem:[%s6 + $0x18] sm:$0xff]
        %v1483 = vld [vmem:[%s6 + $0x20] sm:$0xff]
        %v1484 = vld [vmem:[%s6 + $0x28] sm:$0xff]
        %v1485 = vld [vmem:[%s6 + $0x30] sm:$0xff]
        %v1486 = vld [vmem:[%s6 + $0x38] sm:$0xff]
        %v1487 = vld [vmem:[%s6 + $0x40] sm:$0xff]
        %v1488 = vld [vmem:[%s6 + $0x48] sm:$0xff]
        %v1489 = vld [vmem:[%s6 + $0x50] sm:$0xff]
        %v1490 = vld [vmem:[%s6 + $0x58] sm:$0xff]
        %v1491 = vld [vmem:[%s6 + $0x60] sm:$0xff]
        %v1492 = vld [vmem:[%s6 + $0x68] sm:$0xff]
        %v1493 = vld [vmem:[%s6 + $0x70] sm:$0xff]
        %v1494 = vld [vmem:[%s6 + $0x78] sm:$0xff]
        %v1519 = vlaneseq
        %v1520 = vand.u32 %v1519, 127
        %v1521 = vlaneseq
        %v1522 = vshrl.u32 %v1521, 7
        %v1523 = vsub.s32 %v1520, %v1522
        %v1524 = vrot.slane %v1409, %v1523
        %v1525 = vadd.s32 %v1520, 4294967288
        %v1526 = vlaneseq
        %v1527 = vshrl.u32 %v1526, 7
        %v1528 = vsub.s32 %v1525, %v1527
        %v1529 = vrot.slane %v1412, %v1528
        %vm1530 = vcmask 130112
        %v1531 = vsel %vm1530, %v1529, %v1524
        %v1532 = vadd.s32 %v1520, 4294967280
        %v1533 = vlaneseq
        %v1534 = vshrl.u32 %v1533, 7
        %v1535 = vsub.s32 %v1532, %v1534
        %v1536 = vrot.slane %v1415, %v1535
        %vm1537 = vcmask 195712
        %v1538 = vsel %vm1537, %v1536, %v1531
        %v1539 = vadd.s32 %v1520, 4294967272
        %v1540 = vlaneseq
        %v1541 = vshrl.u32 %v1540, 7
        %v1542 = vsub.s32 %v1539, %v1541
        %v1543 = vrot.slane %v1418, %v1542
        %vm1544 = vcmask 261312
        %v1545 = vsel %vm1544, %v1543, %v1538
        %v1546 = vadd.s32 %v1520, 4294967264
        %v1547 = vlaneseq
        %v1548 = vshrl.u32 %v1547, 7
        %v1549 = vsub.s32 %v1546, %v1548
        %v1550 = vrot.slane %v1421, %v1549
        %vm1551 = vcmask 326912
        %v1552 = vsel %vm1551, %v1550, %v1545
        %v1553 = vadd.s32 %v1520, 4294967256
        %v1554 = vlaneseq
        %v1555 = vshrl.u32 %v1554, 7
        %v1556 = vsub.s32 %v1553, %v1555
        %v1557 = vrot.slane %v1424, %v1556
        %vm1558 = vcmask 392512
        %v1559 = vsel %vm1558, %v1557, %v1552
        %v1560 = vadd.s32 %v1520, 4294967248
        %v1561 = vlaneseq
        %v1562 = vshrl.u32 %v1561, 7
        %v1563 = vsub.s32 %v1560, %v1562
        %v1564 = vrot.slane %v1427, %v1563
        %vm1565 = vcmask 458112
        %v1566 = vsel %vm1565, %v1564, %v1559
        %v1567 = vadd.s32 %v1520, 4294967240
        %v1568 = vlaneseq
        %v1569 = vshrl.u32 %v1568, 7
        %v1570 = vsub.s32 %v1567, %v1569
        %v1571 = vrot.slane %v1430, %v1570
        %vm1572 = vcmask 523712
        %v1573 = vsel %vm1572, %v1571, %v1566
        %v1574 = vlaneseq
        %v1575 = vshrl.u32 %v1574, 7
        %v1576 = vsub.s32 %v1520, %v1575
        %v1577 = vrot.slane %v1433, %v1576
        %v1578 = vlaneseq
        %v1579 = vshrl.u32 %v1578, 7
        %v1580 = vsub.s32 %v1525, %v1579
        %v1581 = vrot.slane %v1436, %v1580
        %v1582 = vsel %vm1530, %v1581, %v1577
        %v1583 = vlaneseq
        %v1584 = vshrl.u32 %v1583, 7
        %v1585 = vsub.s32 %v1532, %v1584
        %v1586 = vrot.slane %v1439, %v1585
        %v1587 = vsel %vm1537, %v1586, %v1582
        %v1588 = vlaneseq
        %v1589 = vshrl.u32 %v1588, 7
        %v1590 = vsub.s32 %v1539, %v1589
        %v1591 = vrot.slane %v1442, %v1590
        %v1592 = vsel %vm1544, %v1591, %v1587
        %v1593 = vlaneseq
        %v1594 = vshrl.u32 %v1593, 7
        %v1595 = vsub.s32 %v1546, %v1594
        %v1596 = vrot.slane %v1445, %v1595
        %v1597 = vsel %vm1551, %v1596, %v1592
        %v1598 = vlaneseq
        %v1599 = vshrl.u32 %v1598, 7
        %v1600 = vsub.s32 %v1553, %v1599
        %v1601 = vrot.slane %v1448, %v1600
        %v1602 = vsel %vm1558, %v1601, %v1597
        %v1603 = vlaneseq
        %v1604 = vshrl.u32 %v1603, 7
        %v1605 = vsub.s32 %v1560, %v1604
        %v1606 = vrot.slane %v1451, %v1605
        %v1607 = vsel %vm1565, %v1606, %v1602
        %v1608 = vlaneseq
        %v1609 = vshrl.u32 %v1608, 7
        %v1610 = vsub.s32 %v1567, %v1609
        %v1611 = vrot.slane %v1454, %v1610
        %v1612 = vsel %vm1572, %v1611, %v1607
        %v1613 = vlaneseq
        %v1614 = vshrl.u32 %v1613, 7
        %v1615 = vsub.s32 %v1520, %v1614
        %v1616 = vrot.slane %v1457, %v1615
        %v1617 = vlaneseq
        %v1618 = vshrl.u32 %v1617, 7
        %v1619 = vsub.s32 %v1525, %v1618
        %v1620 = vrot.slane %v1460, %v1619
        %v1621 = vsel %vm1530, %v1620, %v1616
        %v1622 = vlaneseq
        %v1623 = vshrl.u32 %v1622, 7
        %v1624 = vsub.s32 %v1532, %v1623
        %v1625 = vrot.slane %v1463, %v1624
        %v1626 = vsel %vm1537, %v1625, %v1621
        %v1627 = vlaneseq
        %v1628 = vshrl.u32 %v1627, 7
        %v1629 = vsub.s32 %v1539, %v1628
        %v1630 = vrot.slane %v1466, %v1629
        %v1631 = vsel %vm1544, %v1630, %v1626
        %v1632 = vlaneseq
        %v1633 = vshrl.u32 %v1632, 7
        %v1634 = vsub.s32 %v1546, %v1633
        %v1635 = vrot.slane %v1469, %v1634
        %v1636 = vsel %vm1551, %v1635, %v1631
        %v1637 = vlaneseq
        %v1638 = vshrl.u32 %v1637, 7
        %v1639 = vsub.s32 %v1553, %v1638
        %v1640 = vrot.slane %v1472, %v1639
        %v1641 = vsel %vm1558, %v1640, %v1636
        %v1642 = vlaneseq
        %v1643 = vshrl.u32 %v1642, 7
        %v1644 = vsub.s32 %v1560, %v1643
        %v1645 = vrot.slane %v1475, %v1644
        %v1646 = vsel %vm1565, %v1645, %v1641
        %v1647 = vlaneseq
        %v1648 = vshrl.u32 %v1647, 7
        %v1649 = vsub.s32 %v1567, %v1648
        %v1650 = vrot.slane %v1478, %v1649
        %v1651 = vsel %vm1572, %v1650, %v1646
        %vm1652 = vcmask 1041409
        %v1653 = vsel %vm1652, %v1612, %v1573
        %vm1654 = vcmask 1042434
        %v1655 = vsel %vm1654, %v1651, %v1653
        %v1656 = vsel %vm1079, %v1655, 0
        %1658 = vmatprep.subr.mxu0 0.0
        %1659 = vmatpush1.msra.mxu0 0.0
        %1660 = vmatprep.subr.mxu0 0.0
        %1661 = vmatpush1.msra.mxu0 0.0
        %1662 = vmatprep.subr.mxu0 0.0
        %1663 = vmatpush1.msra.mxu0 0.0
        %1664 = vmatprep.subr.mxu0 0.0
        %1665 = vmatpush1.msra.mxu0 0.0
        %1666 = vmatprep.subr.mxu0 0.0
        %1667 = vmatpush1.msra.mxu0 0.0
        %1668 = vmatprep.subr.mxu0 0.0
        %1669 = vmatpush1.msra.mxu0 0.0
        %1670 = vmatprep.subr.mxu0 0.0
        %1671 = vmatpush1.msra.mxu0 0.0
        %1672 = vmatprep.subr.mxu0 0.0
        %1673 = vmatpush1.msra.mxu0 0.0
        %1674 = vmatprep.subr.mxu0 %v1494
        %1675 = vmatpush1.msra.mxu0 %v1493
        %1676 = vmatprep.subr.mxu0 %v1492
        %1677 = vmatpush1.msra.mxu0 %v1491
        %1678 = vmatprep.subr.mxu0 %v1490
        %1679 = vmatpush1.msra.mxu0 %v1489
        %1680 = vmatprep.subr.mxu0 %v1488
        %1681 = vmatpush1.msra.mxu0 %v1487
        %1682 = vmatprep.subr.mxu0 %v1486
        %1683 = vmatpush1.msra.mxu0 %v1485
        %1684 = vmatprep.subr.mxu0 %v1484
        %1685 = vmatpush1.msra.mxu0 %v1483
        %1686 = vmatprep.subr.mxu0 %v1482
        %1687 = vmatpush1.msra.mxu0 %v1481
        %1688 = vmatprep.subr.mxu0 %v1480
        %1689 = vmatpush1.msra.mxu0 %v1479
        %1690 = vmatprep.subr.mxu0 0.0
        %1691 = vmatpush2.msra.mxu0 0.0
        %1692 = vmatprep.subr.mxu0 0.0
        %1693 = vmatpush2.msra.mxu0 0.0
        %1694 = vmatprep.subr.mxu0 0.0
        %1695 = vmatpush2.msra.mxu0 0.0
        %1696 = vmatprep.subr.mxu0 0.0
        %1697 = vmatpush2.msra.mxu0 0.0
        %1698 = vmatprep.subr.mxu0 0.0
        %1699 = vmatpush2.msra.mxu0 0.0
        %1700 = vmatprep.subr.mxu0 0.0
        %1701 = vmatpush2.msra.mxu0 0.0
        %1702 = vmatprep.subr.mxu0 0.0
        %1703 = vmatpush2.msra.mxu0 0.0
        %1704 = vmatprep.subr.mxu0 0.0
        %1705 = vmatpush2.msra.mxu0 0.0
        %1706 = vmatprep.subr.mxu0 0.0
        %1707 = vmatpush2.msra.mxu0 0.0
        %1708 = vmatprep.subr.mxu0 0.0
        %1709 = vmatpush2.msra.mxu0 0.0
        %1710 = vmatprep.subr.mxu0 0.0
        %1711 = vmatpush2.msra.mxu0 0.0
        %1712 = vmatprep.subr.mxu0 0.0
        %1713 = vmatpush2.msra.mxu0 0.0
        %1714 = vmatprep.subr.mxu0 0.0
        %1715 = vmatpush2.msra.mxu0 0.0
        %1716 = vmatprep.subr.mxu0 0.0
        %1717 = vmatpush2.msra.mxu0 0.0
        %1718 = vmatprep.subr.mxu0 0.0
        %1719 = vmatpush2.msra.mxu0 0.0
        %1720 = vmatprep.subr.mxu0 0.0
        %1721 = vmatpush2.msra.mxu0 0.0
        %1722 = vmatprep.mubr.f32.mxu0 0.0
        %1723 = vmatmul.mubr.f32.gmra.mxu0 %v1656
        %v1724 = vpop.f32.mrf.mxu0
        %v1725 = vadd.f32 0.0, %v1724
        %v1726 = vpop.f32.mrf.mxu0
        %v1727 = vadd.f32 0.0, %v1726
        %1728 = vdwg.mxu0
        %vm1729 = vcmask 1042432
        %v1730 = vsel %vm1729, %v1725, 0.0
        %v1731 = vrot.slane %v1730, 4
        %v1732 = vadd.f32 %v1730, %v1731
        %v1733 = vrot.slane %v1732, 2
        %v1734 = vadd.f32 %v1732, %v1733
        %v1735 = vrot.slane %v1734, 1
        %v1736 = vadd.f32 %v1734, %v1735
        %v1737 = vsel %vm1729, %v1727, 0.0
        %v1738 = vrot.slane %v1737, 4
        %v1739 = vadd.f32 %v1737, %v1738
        %v1740 = vrot.slane %v1739, 2
        %v1741 = vadd.f32 %v1739, %v1740
        %v1742 = vrot.slane %v1741, 1
        %v1743 = vadd.f32 %v1741, %v1742
        %v1744 = vrcp.pop 3.0
        %v1745 = vmul.f32 %v1736, %v1744
        %v1746 = vmul.f32 %v1743, %v1744
        %v1747 = vsub.f32 %v1725, %v1745
        %v1748 = vsub.f32 %v1727, %v1746
        %v1749 = vmul.f32 %v1747, %v1747
        %v1750 = vmul.f32 %v1748, %v1748
        %v1751 = vsel %vm1729, %v1749, 0.0
        %v1752 = vrot.slane %v1751, 4
        %v1753 = vadd.f32 %v1751, %v1752
        %v1754 = vrot.slane %v1753, 2
        %v1755 = vadd.f32 %v1753, %v1754
        %v1756 = vrot.slane %v1755, 1
        %v1757 = vadd.f32 %v1755, %v1756
        %v1758 = vsel %vm1729, %v1750, 0.0
        %v1759 = vrot.slane %v1758, 4
        %v1760 = vadd.f32 %v1758, %v1759
        %v1761 = vrot.slane %v1760, 2
        %v1762 = vadd.f32 %v1760, %v1761
        %v1763 = vrot.slane %v1762, 1
        %v1764 = vadd.f32 %v1762, %v1763
        %v1765 = vmul.f32 %v1757, 0.5
        %v1766 = vmul.f32 %v1764, 0.5
        %v1767 = vrsqrt.pop %v1765
        %v1768 = vmul.f32 %v1765, %v1767
        %vm1769 = vcmp.eq.f32.partialorder %v1765, inf
        %v1770 = vsel %vm1769, %v1765, %v1768
        %vm1771 = vcmp.eq.f32.partialorder %v1765, 0.0
        %v1772 = vand.u32 %v1765, 2147483648
        %v1773 = vsel %vm1771, %v1772, %v1770
        %v1774 = vrsqrt.pop %v1766
        %v1775 = vmul.f32 %v1766, %v1774
        %vm1776 = vcmp.eq.f32.partialorder %v1766, inf
        %v1777 = vsel %vm1776, %v1766, %v1775
        %vm1778 = vcmp.eq.f32.partialorder %v1766, 0.0
        %v1779 = vand.u32 %v1766, 2147483648
        %v1780 = vsel %vm1778, %v1779, %v1777
        %v1781 = vlaneseq
        %v1782 = vshrl.u32 %v1781, 7
        %v1783 = vadd.s32 %v1782, 8
        %v1784 = vcvt.s32.f32 %v1782
        %v1785 = vcvt.s32.f32 %v1783
        %v1786 = vrcp.pop 15.0
        %v1787 = vmul.f32 %v1784, %v1786
        %v1788 = vmul.f32 %v1785, %v1786
        %v1789 = vtanh.pop %v1745
        %v1790 = vtanh.pop %v1746
        %v1791 = vmax.f32 %v1789, 0.0
        %v1792 = vmax.f32 %v1790, 0.0
        %v1793 = vmin.f32 %v1791, 1.0
        %v1794 = vmin.f32 %v1792, 1.0
        %v1795 = vsub.f32 %v1793, %v1787
        %v1796 = vsub.f32 %v1794, %v1787
        %v1797 = vsub.f32 %v1793, %v1788
        %v1798 = vsub.f32 %v1794, %v1788
        %v1799 = vand.u32 2147483647, %v1795
        %v1800 = vand.u32 2147483647, %v1796
        %v1801 = vand.u32 2147483647, %v1797
        %v1802 = vand.u32 2147483647, %v1798
        %v1803 = vmul.f32 %v1799, 15.0
        %v1804 = vmul.f32 %v1800, 15.0
        %v1805 = vmul.f32 %v1801, 15.0
        %v1806 = vmul.f32 %v1802, 15.0
        %v1807 = vsub.f32 1.0, %v1803
        %v1808 = vsub.f32 1.0, %v1804
        %v1809 = vsub.f32 1.0, %v1805
        %v1810 = vsub.f32 1.0, %v1806
        %v1811 = vmax.f32 %v1807, 0.0
        %v1812 = vmax.f32 %v1808, 0.0
        %v1813 = vmax.f32 %v1809, 0.0
        %v1814 = vmax.f32 %v1810, 0.0
        %v1815 = vtanh.pop %v1773
        %v1816 = vtanh.pop %v1780
        %v1817 = vmax.f32 %v1815, 0.0
        %v1818 = vmax.f32 %v1816, 0.0
        %v1819 = vmin.f32 %v1817, 1.0
        %v1820 = vmin.f32 %v1818, 1.0
        %v1821 = vsub.f32 %v1819, %v1787
        %v1822 = vsub.f32 %v1820, %v1787
        %v1823 = vsub.f32 %v1819, %v1788
        %v1824 = vsub.f32 %v1820, %v1788
        %v1825 = vand.u32 2147483647, %v1821
        %v1826 = vand.u32 2147483647, %v1822
        %v1827 = vand.u32 2147483647, %v1823
        %v1828 = vand.u32 2147483647, %v1824
        %v1829 = vmul.f32 %v1825, 15.0
        %v1830 = vmul.f32 %v1826, 15.0
        %v1831 = vmul.f32 %v1827, 15.0
        %v1832 = vmul.f32 %v1828, 15.0
        %v1833 = vsub.f32 1.0, %v1829
        %v1834 = vsub.f32 1.0, %v1830
        %v1835 = vsub.f32 1.0, %v1831
        %v1836 = vsub.f32 1.0, %v1832
        %v1837 = vmax.f32 %v1833, 0.0
        %v1838 = vmax.f32 %v1834, 0.0
        %v1839 = vmax.f32 %v1835, 0.0
        %v1840 = vmax.f32 %v1836, 0.0
        %v1841 = vld [vmem:[%s7] sm:$0xff]
        %v1842 = vld [vmem:[%s7 + $0x8] sm:$0xff]
        %v1843 = vld [vmem:[%s7 + $0x10] sm:$0xff]
        %v1844 = vld [vmem:[%s7 + $0x18] sm:$0xff]
        %v1845 = vld [vmem:[%s7 + $0x20] sm:$0xff]
        %v1846 = vld [vmem:[%s7 + $0x28] sm:$0xff]
        %v1847 = vld [vmem:[%s7 + $0x30] sm:$0xff]
        %v1848 = vld [vmem:[%s7 + $0x38] sm:$0xff]
        %v1849 = vld [vmem:[%s8] sm:$0xff]
        %v1850 = vld [vmem:[%s8 + $0x8] sm:$0xff]
        %v1851 = vld [vmem:[%s8 + $0x10] sm:$0xff]
        %v1852 = vld [vmem:[%s8 + $0x18] sm:$0xff]
        %v1853 = vld [vmem:[%s8 + $0x20] sm:$0xff]
        %v1854 = vld [vmem:[%s8 + $0x28] sm:$0xff]
        %v1855 = vld [vmem:[%s8 + $0x30] sm:$0xff]
        %v1856 = vld [vmem:[%s8 + $0x38] sm:$0xff]
        %1858 = vset.pattern.permute.xlu0 0
        %1859 = vperm.xlu0 %1858, %v1849
        %v1860 = vpop.permute.xlu0 %1859
        %1863 = vset.pattern.permute.xlu0 0
        %1864 = vperm.xlu0 %1863, %v1850
        %v1865 = vpop.permute.xlu0 %1864
        %1868 = vset.pattern.permute.xlu0 0
        %1869 = vperm.xlu0 %1868, %v1851
        %v1870 = vpop.permute.xlu0 %1869
        %1873 = vset.pattern.permute.xlu0 0
        %1874 = vperm.xlu0 %1873, %v1852
        %v1875 = vpop.permute.xlu0 %1874
        %1878 = vset.pattern.permute.xlu0 0
        %1879 = vperm.xlu0 %1878, %v1853
        %v1880 = vpop.permute.xlu0 %1879
        %1883 = vset.pattern.permute.xlu0 0
        %1884 = vperm.xlu0 %1883, %v1854
        %v1885 = vpop.permute.xlu0 %1884
        %1888 = vset.pattern.permute.xlu0 0
        %1889 = vperm.xlu0 %1888, %v1855
        %v1890 = vpop.permute.xlu0 %1889
        %1893 = vset.pattern.permute.xlu0 0
        %1894 = vperm.xlu0 %1893, %v1856
        %v1895 = vpop.permute.xlu0 %1894
        %vm1897 = vcmask 261120
        %v1899 = vsel %vm1897, %v1841, 0
        %v1902 = vsel %vm1897, %v1842, 0
        %v1905 = vsel %vm1897, %v1843, 0
        %v1908 = vsel %vm1897, %v1844, 0
        %v1911 = vsel %vm1897, %v1845, 0
        %v1914 = vsel %vm1897, %v1846, 0
        %v1917 = vsel %vm1897, %v1847, 0
        %v1920 = vsel %vm1897, %v1848, 0
        %1922 = vmatprep.subr.mxu0 0.0
        %1923 = vmatpush1.msra.mxu0 0.0
        %1924 = vmatprep.subr.mxu0 0.0
        %1925 = vmatpush1.msra.mxu0 0.0
        %1926 = vmatprep.subr.mxu0 0.0
        %1927 = vmatpush1.msra.mxu0 0.0
        %1928 = vmatprep.subr.mxu0 0.0
        %1929 = vmatpush1.msra.mxu0 0.0
        %1930 = vmatprep.subr.mxu0 0.0
        %1931 = vmatpush1.msra.mxu0 0.0
        %1932 = vmatprep.subr.mxu0 0.0
        %1933 = vmatpush1.msra.mxu0 0.0
        %1934 = vmatprep.subr.mxu0 0.0
        %1935 = vmatpush1.msra.mxu0 0.0
        %1936 = vmatprep.subr.mxu0 0.0
        %1937 = vmatpush1.msra.mxu0 0.0
        %1938 = vmatprep.subr.mxu0 0.0
        %1939 = vmatpush1.msra.mxu0 0.0
        %1940 = vmatprep.subr.mxu0 0.0
        %1941 = vmatpush1.msra.mxu0 0.0
        %1942 = vmatprep.subr.mxu0 0.0
        %1943 = vmatpush1.msra.mxu0 0.0
        %1944 = vmatprep.subr.mxu0 0.0
        %1945 = vmatpush1.msra.mxu0 0.0
        %1946 = vmatprep.subr.mxu0 %v1840
        %1947 = vmatpush1.msra.mxu0 %v1839
        %1948 = vmatprep.subr.mxu0 %v1838
        %1949 = vmatpush1.msra.mxu0 %v1837
        %1950 = vmatprep.subr.mxu0 %v1814
        %1951 = vmatpush1.msra.mxu0 %v1813
        %1952 = vmatprep.subr.mxu0 %v1812
        %1953 = vmatpush1.msra.mxu0 %v1811
        %1954 = vmatprep.subr.mxu0 0.0
        %1955 = vmatpush2.msra.mxu0 0.0
        %1956 = vmatprep.subr.mxu0 0.0
        %1957 = vmatpush2.msra.mxu0 0.0
        %1958 = vmatprep.subr.mxu0 0.0
        %1959 = vmatpush2.msra.mxu0 0.0
        %1960 = vmatprep.subr.mxu0 0.0
        %1961 = vmatpush2.msra.mxu0 0.0
        %1962 = vmatprep.subr.mxu0 0.0
        %1963 = vmatpush2.msra.mxu0 0.0
        %1964 = vmatprep.subr.mxu0 0.0
        %1965 = vmatpush2.msra.mxu0 0.0
        %1966 = vmatprep.subr.mxu0 0.0
        %1967 = vmatpush2.msra.mxu0 0.0
        %1968 = vmatprep.subr.mxu0 0.0
        %1969 = vmatpush2.msra.mxu0 0.0
        %1970 = vmatprep.subr.mxu0 0.0
        %1971 = vmatpush2.msra.mxu0 0.0
        %1972 = vmatprep.subr.mxu0 0.0
        %1973 = vmatpush2.msra.mxu0 0.0
        %1974 = vmatprep.subr.mxu0 0.0
        %1975 = vmatpush2.msra.mxu0 0.0
        %1976 = vmatprep.subr.mxu0 0.0
        %1977 = vmatpush2.msra.mxu0 0.0
        %1978 = vmatprep.subr.mxu0 0.0
        %1979 = vmatpush2.msra.mxu0 0.0
        %1980 = vmatprep.subr.mxu0 0.0
        %1981 = vmatpush2.msra.mxu0 0.0
        %1982 = vmatprep.subr.mxu0 0.0
        %1983 = vmatpush2.msra.mxu0 0.0
        %1984 = vmatprep.subr.mxu0 0.0
        %1985 = vmatpush2.msra.mxu0 0.0
        %1986 = vmatprep.mubr.f32.mxu0 0.0
        %1987 = vmatmul.mubr.f32.gmra.mxu0 %v1899
        %v1988 = vpop.f32.mrf.mxu0
        %v1989 = vadd.f32 %v1860, %v1988
        %v1990 = vpop.f32.mrf.mxu0
        %v1991 = vadd.f32 %v1860, %v1990
        %1992 = vmatprep.mubr.f32.mxu0 0.0
        %1993 = vmatmul.mubr.f32.gmra.mxu0 %v1902
        %v1994 = vpop.f32.mrf.mxu0
        %v1995 = vadd.f32 %v1865, %v1994
        %v1996 = vpop.f32.mrf.mxu0
        %v1997 = vadd.f32 %v1865, %v1996
        %1998 = vmatprep.mubr.f32.mxu0 0.0
        %1999 = vmatmul.mubr.f32.gmra.mxu0 %v1905
        %v2000 = vpop.f32.mrf.mxu0
        %v2001 = vadd.f32 %v1870, %v2000
        %v2002 = vpop.f32.mrf.mxu0
        %v2003 = vadd.f32 %v1870, %v2002
        %2004 = vmatprep.mubr.f32.mxu0 0.0
        %2005 = vmatmul.mubr.f32.gmra.mxu0 %v1908
        %v2006 = vpop.f32.mrf.mxu0
        %v2007 = vadd.f32 %v1875, %v2006
        %v2008 = vpop.f32.mrf.mxu0
        %v2009 = vadd.f32 %v1875, %v2008
        %2010 = vmatprep.mubr.f32.mxu0 0.0
        %2011 = vmatmul.mubr.f32.gmra.mxu0 %v1911
        %v2012 = vpop.f32.mrf.mxu0
        %v2013 = vadd.f32 %v1880, %v2012
        %v2014 = vpop.f32.mrf.mxu0
        %v2015 = vadd.f32 %v1880, %v2014
        %2016 = vmatprep.mubr.f32.mxu0 0.0
        %2017 = vmatmul.mubr.f32.gmra.mxu0 %v1914
        %v2018 = vpop.f32.mrf.mxu0
        %v2019 = vadd.f32 %v1885, %v2018
        %v2020 = vpop.f32.mrf.mxu0
        %v2021 = vadd.f32 %v1885, %v2020
        %2022 = vmatprep.mubr.f32.mxu0 0.0
        %2023 = vmatmul.mubr.f32.gmra.mxu0 %v1917
        %v2024 = vpop.f32.mrf.mxu0
        %v2025 = vadd.f32 %v1890, %v2024
        %v2026 = vpop.f32.mrf.mxu0
        %v2027 = vadd.f32 %v1890, %v2026
        %2028 = vmatprep.mubr.f32.mxu0 0.0
        %2029 = vmatmul.mubr.f32.gmra.mxu0 %v1920
        %v2030 = vpop.f32.mrf.mxu0
        %v2031 = vadd.f32 %v1895, %v2030
        %v2032 = vpop.f32.mrf.mxu0
        %v2033 = vadd.f32 %v1895, %v2032
        %2034 = vdwg.mxu0
        %v2035 = vmax.f32 %v1989, 0.0
        %v2036 = vmax.f32 %v1991, 0.0
        %v2037 = vmax.f32 %v1995, 0.0
        %v2038 = vmax.f32 %v1997, 0.0
        %v2039 = vmax.f32 %v2001, 0.0
        %v2040 = vmax.f32 %v2003, 0.0
        %v2041 = vmax.f32 %v2007, 0.0
        %v2042 = vmax.f32 %v2009, 0.0
        %v2043 = vmax.f32 %v2013, 0.0
        %v2044 = vmax.f32 %v2015, 0.0
        %v2045 = vmax.f32 %v2019, 0.0
        %v2046 = vmax.f32 %v2021, 0.0
        %v2047 = vmax.f32 %v2025, 0.0
        %v2048 = vmax.f32 %v2027, 0.0
        %v2049 = vmax.f32 %v2031, 0.0
        %v2050 = vmax.f32 %v2033, 0.0
        %v2051 = vld [vmem:[%s9] sm:$0x1]
        %v2052 = vstv %s431
        %v2054 = vsel %vm1079, %v2051, 0
        %2056 = vmatprep.subr.mxu0 0.0
        %2057 = vmatpush1.msra.mxu0 0.0
        %2058 = vmatprep.subr.mxu0 0.0
        %2059 = vmatpush1.msra.mxu0 0.0
        %2060 = vmatprep.subr.mxu0 0.0
        %2061 = vmatpush1.msra.mxu0 0.0
        %2062 = vmatprep.subr.mxu0 0.0
        %2063 = vmatpush1.msra.mxu0 0.0
        %2064 = vmatprep.subr.mxu0 0.0
        %2065 = vmatpush1.msra.mxu0 0.0
        %2066 = vmatprep.subr.mxu0 0.0
        %2067 = vmatpush1.msra.mxu0 0.0
        %2068 = vmatprep.subr.mxu0 0.0
        %2069 = vmatpush1.msra.mxu0 0.0
        %2070 = vmatprep.subr.mxu0 0.0
        %2071 = vmatpush1.msra.mxu0 0.0
        %2072 = vmatprep.subr.mxu0 %v2050
        %2073 = vmatpush1.msra.mxu0 %v2049
        %2074 = vmatprep.subr.mxu0 %v2048
        %2075 = vmatpush1.msra.mxu0 %v2047
        %2076 = vmatprep.subr.mxu0 %v2046
        %2077 = vmatpush1.msra.mxu0 %v2045
        %2078 = vmatprep.subr.mxu0 %v2044
        %2079 = vmatpush1.msra.mxu0 %v2043
        %2080 = vmatprep.subr.mxu0 %v2042
        %2081 = vmatpush1.msra.mxu0 %v2041
        %2082 = vmatprep.subr.mxu0 %v2040
        %2083 = vmatpush1.msra.mxu0 %v2039
        %2084 = vmatprep.subr.mxu0 %v2038
        %2085 = vmatpush1.msra.mxu0 %v2037
        %2086 = vmatprep.subr.mxu0 %v2036
        %2087 = vmatpush1.msra.mxu0 %v2035
        %2088 = vmatprep.subr.mxu0 0.0
        %2089 = vmatpush2.msra.mxu0 0.0
        %2090 = vmatprep.subr.mxu0 0.0
        %2091 = vmatpush2.msra.mxu0 0.0
        %2092 = vmatprep.subr.mxu0 0.0
        %2093 = vmatpush2.msra.mxu0 0.0
        %2094 = vmatprep.subr.mxu0 0.0
        %2095 = vmatpush2.msra.mxu0 0.0
        %2096 = vmatprep.subr.mxu0 0.0
        %2097 = vmatpush2.msra.mxu0 0.0
        %2098 = vmatprep.subr.mxu0 0.0
        %2099 = vmatpush2.msra.mxu0 0.0
        %2100 = vmatprep.subr.mxu0 0.0
        %2101 = vmatpush2.msra.mxu0 0.0
        %2102 = vmatprep.subr.mxu0 0.0
        %2103 = vmatpush2.msra.mxu0 0.0
        %2104 = vmatprep.subr.mxu0 0.0
        %2105 = vmatpush2.msra.mxu0 0.0
        %2106 = vmatprep.subr.mxu0 0.0
        %2107 = vmatpush2.msra.mxu0 0.0
        %2108 = vmatprep.subr.mxu0 0.0
        %2109 = vmatpush2.msra.mxu0 0.0
        %2110 = vmatprep.subr.mxu0 0.0
        %2111 = vmatpush2.msra.mxu0 0.0
        %2112 = vmatprep.subr.mxu0 0.0
        %2113 = vmatpush2.msra.mxu0 0.0
        %2114 = vmatprep.subr.mxu0 0.0
        %2115 = vmatpush2.msra.mxu0 0.0
        %2116 = vmatprep.subr.mxu0 0.0
        %2117 = vmatpush2.msra.mxu0 0.0
        %2118 = vmatprep.subr.mxu0 0.0
        %2119 = vmatpush2.msra.mxu0 0.0
        %2120 = vmatprep.mubr.f32.mxu0 0.0
        %2121 = vmatmul.mubr.f32.gmra.mxu0 %v2054
        %v2122 = vpop.f32.mrf.mxu0
        %v2123 = vadd.f32 %v2052, %v2122
        %v2124 = vpop.f32.mrf.mxu0
        %v2125 = vadd.f32 %v2052, %v2124
        %2126 = vdwg.mxu0
        %v2127 = vmul.f32 %v2123, %v1745
        %v2128 = vmul.f32 %v2125, %v1746
        %vm2129 = vcmp.gt.f32.partialorder %v2127, 20.0
        %vm2130 = vcmp.gt.f32.partialorder %v2128, 20.0
        %v2131 = vmin.f32 %v2127, 20.0
        %v2132 = vmin.f32 %v2128, 20.0
        %v2133 = vmul.f32 %v2131, 1.442695
        %v2134 = vpow.pop %v2133
        %v2135 = vmul.f32 %v2132, 1.442695
        %v2136 = vpow.pop %v2135
        %v2137 = vadd.f32 %v2134, 1.0
        %v2138 = vlog2.pop %v2137
        %v2139 = vmul.f32 %v2138, 0.6931472
        %v2140 = vmul.f32 -0.5, %v2134
        %v2141 = vadd.f32 %v2140, 1.0
        %v2142 = vmul.f32 %v2141, %v2134
        %v2143 = vand.u32 2147483647, %v2134
        %vm2144 = vcmp.lt.f32.partialorder %v2143, 0.0004427343
        %v2145 = vsel %vm2144, %v2142, %v2139
        %v2146 = vadd.f32 %v2136, 1.0
        %v2147 = vlog2.pop %v2146
        %v2148 = vmul.f32 %v2147, 0.6931472
        %v2149 = vmul.f32 -0.5, %v2136
        %v2150 = vadd.f32 %v2149, 1.0
        %v2151 = vmul.f32 %v2150, %v2136
        %v2152 = vand.u32 2147483647, %v2136
        %vm2153 = vcmp.lt.f32.partialorder %v2152, 0.0004427343
        %v2154 = vsel %vm2153, %v2151, %v2148
        %v2155 = vsel %vm2129, %v2127, %v2145
        %v2156 = vsel %vm2130, %v2128, %v2154
        %v2157 = vld [vmem:[%s424] sm:$0x3]
        %v2160 = vcombine.low %v2155, %v2156
        %v2162 = vunpack.c.l.s4 1966171168
        %v2163 = vunpack.c.0.s8 %v2162
        %v2164 = vlaneseq
        %v2165 = vshrl.u32 %v2164, 7
        %v2166 = vsub.s32 %v2163, %v2165
        %v2167 = vrot.slane %v2160, %v2166
        %v2169 = vunpack.c.l.s4 1966171168
        %v2170 = vunpack.c.0.s8 %v2169
        %v2171 = vlaneseq
        %v2172 = vshrl.u32 %v2171, 7
        %v2173 = vsub.s32 %v2170, %v2172
        %v2174 = vrot.slane %v2167, %v2173
        %v2176 = vsub.f32 %v2157, %v2174
        %v2177 = vlaneseq
        %vm2178 = vcmp.ge.s32.totalorder %v2177, 0
        %vm2179 = vcmp.lt.s32.totalorder %v2177, 256
        %vm2180 = vmand %vm2178, %vm2179
        %2181 = vst.msk [vmem:[%s428] sm:$0x3] %vm2180, %v2176
        %p2182 = scmp.lt.s32.totalorder %s22, 1
        %s2183 = scalar_select %p2182, %s22, 1
        %s2184 = smul.addr %s2183, 2
        %s2185 = scalar_lea.vmem %s10, %s2184
        // Predicated region
        $region65: #{attention_learn_score_scaling_forward.1} parent=59 // pred_check
          %p2186 = pneg %p270
        $region66: #{attention_learn_score_scaling_forward.1} parent=59 // pred_check_branch
          %2188 = sbr.rel (%p2186) target = $region68
        $region67: #{attention_learn_score_scaling_forward.1} parent=59 // pred_region
          _
        $region68: #{attention_learn_score_scaling_forward.1} parent=59 // pred_fallthru
          _
      $region60: #{attention_learn_score_scaling_forward.1} parent=5 // pred_fallthru
        _
      %p2189 = scmp.le.s32.totalorder 2, %s17
      // Predicated region
      $region69: #{attention_learn_score_scaling_forward.1} parent=5 // pred_check
        %p2190 = pneg %p2189
      $region70: #{attention_learn_score_scaling_forward.1} parent=5 // pred_check_branch
        %2192 = sbr.rel (%p2190) target = $region72
      $region71: #{attention_learn_score_scaling_forward.1} parent=5 // pred_region
        %s2193 = ssub.s32 %s17, 2
        // Predicated region
        $region73: #{attention_learn_score_scaling_forward.1} parent=71 // pred_check
          %p2194 = pneg %p276
        $region74: #{attention_learn_score_scaling_forward.1} parent=71 // pred_check_branch
          %2196 = sbr.rel (%p2194) target = $region76
        $region75: #{attention_learn_score_scaling_forward.1} parent=71 // pred_region
          %p2197 = scmp.lt.s32.totalorder %s23, 1
          %s2198 = scalar_select %p2197, %s23, 1
          %s2199 = smul.addr %s2198, 2
          %s2200 = scalar_lea.vmem %s10, %s2199
        $region76: #{attention_learn_score_scaling_forward.1} parent=71 // pred_fallthru
          _
      $region72: #{attention_learn_score_scaling_forward.1} parent=5 // pred_fallthru
        _
    $region6: #{attention_learn_score_scaling_forward.1} parent=1 // loop_footer
      %s21 = sadd.s32 1, %s17
    $region7: #{attention_learn_score_scaling_forward.1} parent=1 // loop_footer_branch
      %16 = sbr.rel target = $region3
    $region8: #{attention_learn_score_scaling_forward.1} parent=1 // loop_exit
      _
    %2201 = vsyncpa [#allocation3], 1
    %s2202 = scalar_lea.sflag [#allocation3], 1
    %2203 = vsyncpa %s2202, 1

</llo_original>
